<compile_context>
chip_gen: v6e
topology: v6e:2x2x1
jax: 0.10.0
libtpu: 0.0.40
codegen_flags: <defaults>
</compile_context>

<pallas_src>
import functools

import numpy as np
import jax
import jax.numpy as jnp
from jax.experimental import pallas as pl
from jax.experimental.pallas import tpu as pltpu

IMG = 28
PATCH = 7
N_PATCH = 16
N_QUAD = 4
IN_FEATURES = IMG * IMG            # 784
PATCH_FEATURES = PATCH * PATCH     # 49
OUT_PAD = 128                      # lane-dense padded class dim
NEG_BIG = -1e30                    # pad-lane logit bias (never wins max, exp -> 0)
TILE_M = 512                       # batch tile (rows) for large batches
WEIGHT_DTYPE = jnp.bfloat16

# patch p = 4*r + c covers image rows 7r..7r+6, cols 7c..7c+6 (row-major 4x4 grid);
# quadrant q gathers patches in the exact torch.cat order used by model5.forward
QUAD_PATCHES = ((0, 1, 4, 5), (2, 3, 6, 7), (8, 9, 12, 13), (10, 11, 14, 15))


def _layer_dims(num_classes):
    # (in, out) of linear1..linear11 with hidden_size = 120
    return [
        (PATCH_FEATURES, 120), (120, 90), (90, 60), (60, 30),   # linear1..4 (per patch)
        (120, 90), (90, 60), (60, 30),                          # linear5..7 (per quadrant)
        (120, 90), (90, 60), (60, 30), (30, num_classes),       # linear8..11
    ]


def _round_up(a, b):
    return (a + b - 1) // b * b


# ---------------------------------------------------------------------------
# Parameters
# ---------------------------------------------------------------------------
def init_raw_params(key, num_classes):
    """Deterministic init mirroring nn.Linear default (uniform +/- 1/sqrt(fan_in)).
    Weights stored as (in, out)."""
    dims = _layer_dims(num_classes)
    keys = jax.random.split(key, 2 * len(dims))
    params = []
    for idx, (fan_in, fan_out) in enumerate(dims):
        bound = 1.0 / float(np.sqrt(fan_in))
        w = jax.random.uniform(keys[2 * idx], (fan_in, fan_out), jnp.float32, -bound, bound)
        b = jax.random.uniform(keys[2 * idx + 1], (1, fan_out), jnp.float32, -bound, bound)
        params.append((w, b))
    return params


def pack_params(raw_params, num_classes, weight_dtype=WEIGHT_DTYPE):
    """Flat tuple of small VMEM-resident arrays: bf16 weights (f32 accumulate),
    f32 biases.  Only linear11 is padded (classes -> 128 lanes; pad-lane bias
    -1e30 so the in-kernel log_softmax ignores padded lanes)."""
    assert num_classes <= OUT_PAD
    flat = []
    last = len(raw_params) - 1
    for idx, (w, b) in enumerate(raw_params):
        if idx == last:
            w = jnp.zeros((w.shape[0], OUT_PAD), jnp.float32).at[:, :num_classes].set(w)
            b = jnp.full((1, OUT_PAD), NEG_BIG, jnp.float32).at[:, :num_classes].set(b)
        flat.append(w.astype(weight_dtype))
        flat.append(b.astype(jnp.float32))
    return tuple(flat)


# ---------------------------------------------------------------------------
# Fused kernel: 11 true-size matmul(+ReLU) layers + masked log_softmax in VMEM
# ---------------------------------------------------------------------------
def fused_model5_kernel(x_ref, *refs):
    """x_ref: (16*tile_m, 49) bf16, rows ordered (patch, batch-within-tile).
    refs: w1,b1,...,w11,b11 (VMEM-resident), then out_ref (tile_m, 128)."""
    out_ref = refs[-1]
    (w1, b1, w2, b2, w3, b3, w4, b4, w5, b5, w6, b6,
     w7, b7, w8, b8, w9, b9, w10, b10, w11, b11) = refs[:-1]
    tm = out_ref.shape[0]

    def dense(h, w_ref, b_ref, relu=True):
        y = jnp.dot(h.astype(w_ref.dtype), w_ref[...],
                    preferred_element_type=jnp.float32) + b_ref[...]
        return jnp.maximum(y, 0.0) if relu else y

    # ---- stage A: shared per-patch MLP, all 16 patches batched into the rows
    h = x_ref[...]                                    # (16*tm, 49) bf16
    h = dense(h, w1, b1)                              # (16*tm, 120)
    h = dense(h, w2, b2)                              # (16*tm,  90)
    h = dense(h, w3, b3)                              # (16*tm,  60)
    h = dense(h, w4, b4)                              # (16*tm,  30)

    # ---- stage B: regroup patches -> quadrants (torch.cat order), shared MLP
    quad_in = [
        jnp.concatenate([h[p * tm:(p + 1) * tm, :] for p in plist], axis=1)
        for plist in QUAD_PATCHES                     # 4 x (tm, 120)
    ]
    g = jnp.concatenate(quad_in, axis=0)              # (4*tm, 120)
    g = dense(g, w5, b5)                              # (4*tm,  90)
    g = dense(g, w6, b6)                              # (4*tm,  60)
    g = dense(g, w7, b7)                              # (4*tm,  30)

    # ---- stage C: regroup quadrants, final MLP, masked log_softmax
    z = jnp.concatenate([g[q * tm:(q + 1) * tm, :] for q in range(N_QUAD)], axis=1)
    z = dense(z, w8, b8)                              # (tm, 90)
    z = dense(z, w9, b9)                              # (tm, 60)
    z = dense(z, w10, b10)                            # (tm, 30)
    logits = dense(z, w11, b11, relu=False)           # (tm, 128); pad lanes ~ -1e30

    m = jnp.max(logits, axis=-1, keepdims=True)
    lse = m + jnp.log(jnp.sum(jnp.exp(logits - m), axis=-1, keepdims=True))
    out_ref[...] = logits - lse


# ---------------------------------------------------------------------------
# Wrapper
# ---------------------------------------------------------------------------
def _pick_tile_m(batch):
    if batch >= 2 * TILE_M:
        return TILE_M
    if batch <= 16:
        return _round_up(max(batch, 1), 8)
    # mid-size: make the grid >= 2 so both v7x TensorCores get a tile
    return min(TILE_M, _round_up(-(-batch // 2), 8))


@functools.partial(jax.jit, static_argnums=(2,))
def model5_forward(x, params, num_classes):
    """x: (B, 784) float32 -> (B, num_classes) log-probabilities."""
    B = x.shape[0]
    tile_m = _pick_tile_m(B)
    bp = _round_up(B, tile_m)
    n_tiles = bp // tile_m

    xp = x.astype(jnp.bfloat16)                       # halve the streamed input DMA
    if bp != B:
        xp = jnp.pad(xp, ((0, bp - B), (0, 0)))
    # Patch split as pure layout plumbing (outside the kernel): rows reordered to
    # (tile, patch, batch-within-tile), so each grid block is contiguous and the
    # per-patch rows inside a block are contiguous sublane slices.
    xp = xp.reshape(n_tiles, tile_m, 4, PATCH, 4, PATCH)
    xp = xp.transpose(0, 2, 4, 1, 3, 5)               # (tile, pr, pc, m, i, j)
    xp = xp.reshape(n_tiles * N_PATCH * tile_m, PATCH_FEATURES)

    def resident(p):
        # full-array block, same index every grid step -> stays VMEM-resident
        return pl.BlockSpec(p.shape, lambda i: (0, 0))

    in_specs = [pl.BlockSpec((N_PATCH * tile_m, PATCH_FEATURES), lambda i: (i, 0))]
    in_specs += [resident(p) for p in params]

    out = pl.pallas_call(
        fused_model5_kernel,
        out_shape=jax.ShapeDtypeStruct((bp, OUT_PAD), jnp.float32),
        grid=(n_tiles,),
        in_specs=in_specs,
        out_specs=pl.BlockSpec((tile_m, OUT_PAD), lambda i: (i, 0)),
        compiler_params=pltpu.CompilerParams(
            dimension_semantics=("parallel",),         # batch tiles independent
            vmem_limit_bytes=40 * 1024 * 1024,         # safe on v7x (64 MiB/TC), ample elsewhere
        ),
    )(xp, *params)
    return out[:B, :num_classes]


# ---------------------------------------------------------------------------
# Pure-JAX reference (mirrors the PyTorch split/cat cascade exactly)
# ---------------------------------------------------------------------------
def reference_forward(x, raw_params):
    ws = [w for (w, _) in raw_params]
    bs = [b for (_, b) in raw_params]
    B = x.shape[0]
    img = x.reshape(B, IMG, IMG)

    def patch_mlp(xp):
        h = jax.nn.relu(xp @ ws[0] + bs[0])
        h = jax.nn.relu(h @ ws[1] + bs[1])
        h = jax.nn.relu(h @ ws[2] + bs[2])
        return jax.nn.relu(h @ ws[3] + bs[3])

    outs = []
    for p in range(N_PATCH):
        r, c = divmod(p, 4)
        xp = img[:, PATCH * r:PATCH * (r + 1), PATCH * c:PATCH * (c + 1)].reshape(B, 49)
        outs.append(patch_mlp(xp))

    quads = []
    for plist in QUAD_PATCHES:
        hq = jnp.concatenate([outs[p] for p in plist], axis=1)
        hq = jax.nn.relu(hq @ ws[4] + bs[4])
        hq = jax.nn.relu(hq @ ws[5] + bs[5])
        quads.append(jax.nn.relu(hq @ ws[6] + bs[6]))

    h = jnp.concatenate(quads, axis=1)
    h = jax.nn.relu(h @ ws[7] + bs[7])
    h = jax.nn.relu(h @ ws[8] + bs[8])
    h = jax.nn.relu(h @ ws[9] + bs[9])
    logits = h @ ws[10] + bs[10]
    return jax.nn.log_softmax(logits, axis=-1)


if __name__ == "__main__":
    num_classes = 10
    key = jax.random.PRNGKey(0)
    kx, kp = jax.random.split(key)

    raw = init_raw_params(kp, num_classes)
    params = pack_params(raw, num_classes)

    # tiny batch (grid=1, batch padding) and multi-tile batch (grid=2)
    for batch in (3, 24):
        xb = jax.random.normal(jax.random.fold_in(kx, batch),
                               (batch, IN_FEATURES), dtype=jnp.float32)
        out = jax.block_until_ready(model5_forward(xb, params, num_classes))

        assert out.shape == (batch, num_classes), out.shape
        assert bool(jnp.all(jnp.isfinite(out)))
        # log-softmax rows must exponentiate-sum to 1
        assert jnp.allclose(jnp.sum(jnp.exp(out), axis=-1), 1.0, atol=1e-3)
        # match the exact PyTorch-style cascade (bf16 input/weights -> loose tol)
        ref = reference_forward(xb, raw)
        err = float(jnp.max(jnp.abs(out - ref)))
        assert err < 1.5e-1, err

    print("KERNEL_OK")
</pallas_src>

<mosaic_0001>
module attributes {stable_mosaic.version = 11 : i64} {
  func.func @fused_model5_kernel(%arg0: i32, %arg1: memref<128x49xbf16, #tpu.memory_space<vmem>>, %arg2: memref<49x120xbf16, #tpu.memory_space<vmem>>, %arg3: memref<1x120xf32, #tpu.memory_space<vmem>>, %arg4: memref<120x90xbf16, #tpu.memory_space<vmem>>, %arg5: memref<1x90xf32, #tpu.memory_space<vmem>>, %arg6: memref<90x60xbf16, #tpu.memory_space<vmem>>, %arg7: memref<1x60xf32, #tpu.memory_space<vmem>>, %arg8: memref<60x30xbf16, #tpu.memory_space<vmem>>, %arg9: memref<1x30xf32, #tpu.memory_space<vmem>>, %arg10: memref<120x90xbf16, #tpu.memory_space<vmem>>, %arg11: memref<1x90xf32, #tpu.memory_space<vmem>>, %arg12: memref<90x60xbf16, #tpu.memory_space<vmem>>, %arg13: memref<1x60xf32, #tpu.memory_space<vmem>>, %arg14: memref<60x30xbf16, #tpu.memory_space<vmem>>, %arg15: memref<1x30xf32, #tpu.memory_space<vmem>>, %arg16: memref<120x90xbf16, #tpu.memory_space<vmem>>, %arg17: memref<1x90xf32, #tpu.memory_space<vmem>>, %arg18: memref<90x60xbf16, #tpu.memory_space<vmem>>, %arg19: memref<1x60xf32, #tpu.memory_space<vmem>>, %arg20: memref<60x30xbf16, #tpu.memory_space<vmem>>, %arg21: memref<1x30xf32, #tpu.memory_space<vmem>>, %arg22: memref<30x128xbf16, #tpu.memory_space<vmem>>, %arg23: memref<1x128xf32, #tpu.memory_space<vmem>>, %arg24: memref<8x128xf32, #tpu.memory_space<vmem>>) attributes {dimension_semantics = [#tpu.dimension_semantics<parallel>], iteration_bounds = array<i64: 1>, scalar_prefetch = 0 : i64, scratch_operands = 0 : i64, tpu.core_type = #tpu.core_type<tc>, window_params = [{transform_indices = @transform_0, window_bounds = array<i64: 128, 49>}, {pipeline_mode = #tpu.pipeline_mode<synchronous>, transform_indices = @transform_1, window_bounds = array<i64: 49, 120>}, {pipeline_mode = #tpu.pipeline_mode<synchronous>, transform_indices = @transform_2, window_bounds = array<i64: 1, 120>}, {pipeline_mode = #tpu.pipeline_mode<synchronous>, transform_indices = @transform_3, window_bounds = array<i64: 120, 90>}, {pipeline_mode = #tpu.pipeline_mode<synchronous>, transform_indices = @transform_4, window_bounds = array<i64: 1, 90>}, {pipeline_mode = #tpu.pipeline_mode<synchronous>, transform_indices = @transform_5, window_bounds = array<i64: 90, 60>}, {pipeline_mode = #tpu.pipeline_mode<synchronous>, transform_indices = @transform_6, window_bounds = array<i64: 1, 60>}, {pipeline_mode = #tpu.pipeline_mode<synchronous>, transform_indices = @transform_7, window_bounds = array<i64: 60, 30>}, {pipeline_mode = #tpu.pipeline_mode<synchronous>, transform_indices = @transform_8, window_bounds = array<i64: 1, 30>}, {pipeline_mode = #tpu.pipeline_mode<synchronous>, transform_indices = @transform_9, window_bounds = array<i64: 120, 90>}, {pipeline_mode = #tpu.pipeline_mode<synchronous>, transform_indices = @transform_10, window_bounds = array<i64: 1, 90>}, {pipeline_mode = #tpu.pipeline_mode<synchronous>, transform_indices = @transform_11, window_bounds = array<i64: 90, 60>}, {pipeline_mode = #tpu.pipeline_mode<synchronous>, transform_indices = @transform_12, window_bounds = array<i64: 1, 60>}, {pipeline_mode = #tpu.pipeline_mode<synchronous>, transform_indices = @transform_13, window_bounds = array<i64: 60, 30>}, {pipeline_mode = #tpu.pipeline_mode<synchronous>, transform_indices = @transform_14, window_bounds = array<i64: 1, 30>}, {pipeline_mode = #tpu.pipeline_mode<synchronous>, transform_indices = @transform_15, window_bounds = array<i64: 120, 90>}, {pipeline_mode = #tpu.pipeline_mode<synchronous>, transform_indices = @transform_16, window_bounds = array<i64: 1, 90>}, {pipeline_mode = #tpu.pipeline_mode<synchronous>, transform_indices = @transform_17, window_bounds = array<i64: 90, 60>}, {pipeline_mode = #tpu.pipeline_mode<synchronous>, transform_indices = @transform_18, window_bounds = array<i64: 1, 60>}, {pipeline_mode = #tpu.pipeline_mode<synchronous>, transform_indices = @transform_19, window_bounds = array<i64: 60, 30>}, {pipeline_mode = #tpu.pipeline_mode<synchronous>, transform_indices = @transform_20, window_bounds = array<i64: 1, 30>}, {pipeline_mode = #tpu.pipeline_mode<synchronous>, transform_indices = @transform_21, window_bounds = array<i64: 30, 128>}, {pipeline_mode = #tpu.pipeline_mode<synchronous>, transform_indices = @transform_22, window_bounds = array<i64: 1, 128>}, {transform_indices = @transform_23, window_bounds = array<i64: 8, 128>}]} {
    %c0 = arith.constant 0 : index
    %c0_0 = arith.constant 0 : index
    %0 = vector.load %arg1[%c0, %c0_0] : memref<128x49xbf16, #tpu.memory_space<vmem>>, vector<128x49xbf16>
    %c0_1 = arith.constant 0 : index
    %c0_2 = arith.constant 0 : index
    %1 = vector.load %arg2[%c0_1, %c0_2] : memref<49x120xbf16, #tpu.memory_space<vmem>>, vector<49x120xbf16>
    %cst = arith.constant dense<0.000000e+00> : vector<128x120xf32>
    %2 = tpu.matmul %0, %1, %cst {dimension_numbers = #tpu.dot_dimension_numbers<[1], [0], [0], [1], [0, 0, 1, 1], [], []>} : vector<128x49xbf16>, vector<49x120xbf16>, vector<128x120xf32> -> vector<128x120xf32>
    %c0_3 = arith.constant 0 : index
    %c0_4 = arith.constant 0 : index
    %3 = vector.load %arg3[%c0_3, %c0_4] : memref<1x120xf32, #tpu.memory_space<vmem>>, vector<1x120xf32>
    %4 = vector.broadcast %3 : vector<1x120xf32> to vector<128x120xf32>
    %5 = arith.addf %2, %4 : vector<128x120xf32>
    %cst_5 = arith.constant 0.000000e+00 : f32
    %6 = vector.broadcast %cst_5 : f32 to vector<128x120xf32>
    %7 = arith.maximumf %5, %6 : vector<128x120xf32>
    %8 = arith.truncf %7 : vector<128x120xf32> to vector<128x120xbf16>
    %c0_6 = arith.constant 0 : index
    %c0_7 = arith.constant 0 : index
    %9 = vector.load %arg4[%c0_6, %c0_7] : memref<120x90xbf16, #tpu.memory_space<vmem>>, vector<120x90xbf16>
    %cst_8 = arith.constant dense<0.000000e+00> : vector<128x90xf32>
    %10 = tpu.matmul %8, %9, %cst_8 {dimension_numbers = #tpu.dot_dimension_numbers<[1], [0], [0], [1], [0, 0, 1, 1], [], []>} : vector<128x120xbf16>, vector<120x90xbf16>, vector<128x90xf32> -> vector<128x90xf32>
    %c0_9 = arith.constant 0 : index
    %c0_10 = arith.constant 0 : index
    %11 = vector.load %arg5[%c0_9, %c0_10] : memref<1x90xf32, #tpu.memory_space<vmem>>, vector<1x90xf32>
    %12 = vector.broadcast %11 : vector<1x90xf32> to vector<128x90xf32>
    %13 = arith.addf %10, %12 : vector<128x90xf32>
    %cst_11 = arith.constant 0.000000e+00 : f32
    %14 = vector.broadcast %cst_11 : f32 to vector<128x90xf32>
    %15 = arith.maximumf %13, %14 : vector<128x90xf32>
    %16 = arith.truncf %15 : vector<128x90xf32> to vector<128x90xbf16>
    %c0_12 = arith.constant 0 : index
    %c0_13 = arith.constant 0 : index
    %17 = vector.load %arg6[%c0_12, %c0_13] : memref<90x60xbf16, #tpu.memory_space<vmem>>, vector<90x60xbf16>
    %cst_14 = arith.constant dense<0.000000e+00> : vector<128x60xf32>
    %18 = tpu.matmul %16, %17, %cst_14 {dimension_numbers = #tpu.dot_dimension_numbers<[1], [0], [0], [1], [0, 0, 1, 1], [], []>} : vector<128x90xbf16>, vector<90x60xbf16>, vector<128x60xf32> -> vector<128x60xf32>
    %c0_15 = arith.constant 0 : index
    %c0_16 = arith.constant 0 : index
    %19 = vector.load %arg7[%c0_15, %c0_16] : memref<1x60xf32, #tpu.memory_space<vmem>>, vector<1x60xf32>
    %20 = vector.broadcast %19 : vector<1x60xf32> to vector<128x60xf32>
    %21 = arith.addf %18, %20 : vector<128x60xf32>
    %cst_17 = arith.constant 0.000000e+00 : f32
    %22 = vector.broadcast %cst_17 : f32 to vector<128x60xf32>
    %23 = arith.maximumf %21, %22 : vector<128x60xf32>
    %24 = arith.truncf %23 : vector<128x60xf32> to vector<128x60xbf16>
    %c0_18 = arith.constant 0 : index
    %c0_19 = arith.constant 0 : index
    %25 = vector.load %arg8[%c0_18, %c0_19] : memref<60x30xbf16, #tpu.memory_space<vmem>>, vector<60x30xbf16>
    %cst_20 = arith.constant dense<0.000000e+00> : vector<128x30xf32>
    %26 = tpu.matmul %24, %25, %cst_20 {dimension_numbers = #tpu.dot_dimension_numbers<[1], [0], [0], [1], [0, 0, 1, 1], [], []>} : vector<128x60xbf16>, vector<60x30xbf16>, vector<128x30xf32> -> vector<128x30xf32>
    %c0_21 = arith.constant 0 : index
    %c0_22 = arith.constant 0 : index
    %27 = vector.load %arg9[%c0_21, %c0_22] : memref<1x30xf32, #tpu.memory_space<vmem>>, vector<1x30xf32>
    %28 = vector.broadcast %27 : vector<1x30xf32> to vector<128x30xf32>
    %29 = arith.addf %26, %28 : vector<128x30xf32>
    %cst_23 = arith.constant 0.000000e+00 : f32
    %30 = vector.broadcast %cst_23 : f32 to vector<128x30xf32>
    %31 = arith.maximumf %29, %30 : vector<128x30xf32>
    %32 = vector.extract_strided_slice %31 {offsets = [0, 0], sizes = [8, 30], strides = [1, 1]} : vector<128x30xf32> to vector<8x30xf32>
    %33 = vector.extract_strided_slice %31 {offsets = [8, 0], sizes = [8, 30], strides = [1, 1]} : vector<128x30xf32> to vector<8x30xf32>
    %34 = vector.extract_strided_slice %31 {offsets = [32, 0], sizes = [8, 30], strides = [1, 1]} : vector<128x30xf32> to vector<8x30xf32>
    %35 = vector.extract_strided_slice %31 {offsets = [40, 0], sizes = [8, 30], strides = [1, 1]} : vector<128x30xf32> to vector<8x30xf32>
    %36 = tpu.concatenate %32, %33, %34, %35 in 1 : vector<8x30xf32>, vector<8x30xf32>, vector<8x30xf32>, vector<8x30xf32> -> vector<8x120xf32>
    %37 = vector.extract_strided_slice %31 {offsets = [16, 0], sizes = [8, 30], strides = [1, 1]} : vector<128x30xf32> to vector<8x30xf32>
    %38 = vector.extract_strided_slice %31 {offsets = [24, 0], sizes = [8, 30], strides = [1, 1]} : vector<128x30xf32> to vector<8x30xf32>
    %39 = vector.extract_strided_slice %31 {offsets = [48, 0], sizes = [8, 30], strides = [1, 1]} : vector<128x30xf32> to vector<8x30xf32>
    %40 = vector.extract_strided_slice %31 {offsets = [56, 0], sizes = [8, 30], strides = [1, 1]} : vector<128x30xf32> to vector<8x30xf32>
    %41 = tpu.concatenate %37, %38, %39, %40 in 1 : vector<8x30xf32>, vector<8x30xf32>, vector<8x30xf32>, vector<8x30xf32> -> vector<8x120xf32>
    %42 = vector.extract_strided_slice %31 {offsets = [64, 0], sizes = [8, 30], strides = [1, 1]} : vector<128x30xf32> to vector<8x30xf32>
    %43 = vector.extract_strided_slice %31 {offsets = [72, 0], sizes = [8, 30], strides = [1, 1]} : vector<128x30xf32> to vector<8x30xf32>
    %44 = vector.extract_strided_slice %31 {offsets = [96, 0], sizes = [8, 30], strides = [1, 1]} : vector<128x30xf32> to vector<8x30xf32>
    %45 = vector.extract_strided_slice %31 {offsets = [104, 0], sizes = [8, 30], strides = [1, 1]} : vector<128x30xf32> to vector<8x30xf32>
    %46 = tpu.concatenate %42, %43, %44, %45 in 1 : vector<8x30xf32>, vector<8x30xf32>, vector<8x30xf32>, vector<8x30xf32> -> vector<8x120xf32>
    %47 = vector.extract_strided_slice %31 {offsets = [80, 0], sizes = [8, 30], strides = [1, 1]} : vector<128x30xf32> to vector<8x30xf32>
    %48 = vector.extract_strided_slice %31 {offsets = [88, 0], sizes = [8, 30], strides = [1, 1]} : vector<128x30xf32> to vector<8x30xf32>
    %49 = vector.extract_strided_slice %31 {offsets = [112, 0], sizes = [8, 30], strides = [1, 1]} : vector<128x30xf32> to vector<8x30xf32>
    %50 = vector.extract_strided_slice %31 {offsets = [120, 0], sizes = [8, 30], strides = [1, 1]} : vector<128x30xf32> to vector<8x30xf32>
    %51 = tpu.concatenate %47, %48, %49, %50 in 1 : vector<8x30xf32>, vector<8x30xf32>, vector<8x30xf32>, vector<8x30xf32> -> vector<8x120xf32>
    %52 = tpu.concatenate %36, %41, %46, %51 in 0 : vector<8x120xf32>, vector<8x120xf32>, vector<8x120xf32>, vector<8x120xf32> -> vector<32x120xf32>
    %53 = arith.truncf %52 : vector<32x120xf32> to vector<32x120xbf16>
    %c0_24 = arith.constant 0 : index
    %c0_25 = arith.constant 0 : index
    %54 = vector.load %arg10[%c0_24, %c0_25] : memref<120x90xbf16, #tpu.memory_space<vmem>>, vector<120x90xbf16>
    %cst_26 = arith.constant dense<0.000000e+00> : vector<32x90xf32>
    %55 = tpu.matmul %53, %54, %cst_26 {dimension_numbers = #tpu.dot_dimension_numbers<[1], [0], [0], [1], [0, 0, 1, 1], [], []>} : vector<32x120xbf16>, vector<120x90xbf16>, vector<32x90xf32> -> vector<32x90xf32>
    %c0_27 = arith.constant 0 : index
    %c0_28 = arith.constant 0 : index
    %56 = vector.load %arg11[%c0_27, %c0_28] : memref<1x90xf32, #tpu.memory_space<vmem>>, vector<1x90xf32>
    %57 = vector.broadcast %56 : vector<1x90xf32> to vector<32x90xf32>
    %58 = arith.addf %55, %57 : vector<32x90xf32>
    %cst_29 = arith.constant 0.000000e+00 : f32
    %59 = vector.broadcast %cst_29 : f32 to vector<32x90xf32>
    %60 = arith.maximumf %58, %59 : vector<32x90xf32>
    %61 = arith.truncf %60 : vector<32x90xf32> to vector<32x90xbf16>
    %c0_30 = arith.constant 0 : index
    %c0_31 = arith.constant 0 : index
    %62 = vector.load %arg12[%c0_30, %c0_31] : memref<90x60xbf16, #tpu.memory_space<vmem>>, vector<90x60xbf16>
    %cst_32 = arith.constant dense<0.000000e+00> : vector<32x60xf32>
    %63 = tpu.matmul %61, %62, %cst_32 {dimension_numbers = #tpu.dot_dimension_numbers<[1], [0], [0], [1], [0, 0, 1, 1], [], []>} : vector<32x90xbf16>, vector<90x60xbf16>, vector<32x60xf32> -> vector<32x60xf32>
    %c0_33 = arith.constant 0 : index
    %c0_34 = arith.constant 0 : index
    %64 = vector.load %arg13[%c0_33, %c0_34] : memref<1x60xf32, #tpu.memory_space<vmem>>, vector<1x60xf32>
    %65 = vector.broadcast %64 : vector<1x60xf32> to vector<32x60xf32>
    %66 = arith.addf %63, %65 : vector<32x60xf32>
    %cst_35 = arith.constant 0.000000e+00 : f32
    %67 = vector.broadcast %cst_35 : f32 to vector<32x60xf32>
    %68 = arith.maximumf %66, %67 : vector<32x60xf32>
    %69 = arith.truncf %68 : vector<32x60xf32> to vector<32x60xbf16>
    %c0_36 = arith.constant 0 : index
    %c0_37 = arith.constant 0 : index
    %70 = vector.load %arg14[%c0_36, %c0_37] : memref<60x30xbf16, #tpu.memory_space<vmem>>, vector<60x30xbf16>
    %cst_38 = arith.constant dense<0.000000e+00> : vector<32x30xf32>
    %71 = tpu.matmul %69, %70, %cst_38 {dimension_numbers = #tpu.dot_dimension_numbers<[1], [0], [0], [1], [0, 0, 1, 1], [], []>} : vector<32x60xbf16>, vector<60x30xbf16>, vector<32x30xf32> -> vector<32x30xf32>
    %c0_39 = arith.constant 0 : index
    %c0_40 = arith.constant 0 : index
    %72 = vector.load %arg15[%c0_39, %c0_40] : memref<1x30xf32, #tpu.memory_space<vmem>>, vector<1x30xf32>
    %73 = vector.broadcast %72 : vector<1x30xf32> to vector<32x30xf32>
    %74 = arith.addf %71, %73 : vector<32x30xf32>
    %cst_41 = arith.constant 0.000000e+00 : f32
    %75 = vector.broadcast %cst_41 : f32 to vector<32x30xf32>
    %76 = arith.maximumf %74, %75 : vector<32x30xf32>
    %77 = vector.extract_strided_slice %76 {offsets = [0, 0], sizes = [8, 30], strides = [1, 1]} : vector<32x30xf32> to vector<8x30xf32>
    %78 = vector.extract_strided_slice %76 {offsets = [8, 0], sizes = [8, 30], strides = [1, 1]} : vector<32x30xf32> to vector<8x30xf32>
    %79 = vector.extract_strided_slice %76 {offsets = [16, 0], sizes = [8, 30], strides = [1, 1]} : vector<32x30xf32> to vector<8x30xf32>
    %80 = vector.extract_strided_slice %76 {offsets = [24, 0], sizes = [8, 30], strides = [1, 1]} : vector<32x30xf32> to vector<8x30xf32>
    %81 = tpu.concatenate %77, %78, %79, %80 in 1 : vector<8x30xf32>, vector<8x30xf32>, vector<8x30xf32>, vector<8x30xf32> -> vector<8x120xf32>
    %82 = arith.truncf %81 : vector<8x120xf32> to vector<8x120xbf16>
    %c0_42 = arith.constant 0 : index
    %c0_43 = arith.constant 0 : index
    %83 = vector.load %arg16[%c0_42, %c0_43] : memref<120x90xbf16, #tpu.memory_space<vmem>>, vector<120x90xbf16>
    %cst_44 = arith.constant dense<0.000000e+00> : vector<8x90xf32>
    %84 = tpu.matmul %82, %83, %cst_44 {dimension_numbers = #tpu.dot_dimension_numbers<[1], [0], [0], [1], [0, 0, 1, 1], [], []>} : vector<8x120xbf16>, vector<120x90xbf16>, vector<8x90xf32> -> vector<8x90xf32>
    %c0_45 = arith.constant 0 : index
    %c0_46 = arith.constant 0 : index
    %85 = vector.load %arg17[%c0_45, %c0_46] : memref<1x90xf32, #tpu.memory_space<vmem>>, vector<1x90xf32>
    %86 = vector.broadcast %85 : vector<1x90xf32> to vector<8x90xf32>
    %87 = arith.addf %84, %86 : vector<8x90xf32>
    %cst_47 = arith.constant 0.000000e+00 : f32
    %88 = vector.broadcast %cst_47 : f32 to vector<8x90xf32>
    %89 = arith.maximumf %87, %88 : vector<8x90xf32>
    %90 = arith.truncf %89 : vector<8x90xf32> to vector<8x90xbf16>
    %c0_48 = arith.constant 0 : index
    %c0_49 = arith.constant 0 : index
    %91 = vector.load %arg18[%c0_48, %c0_49] : memref<90x60xbf16, #tpu.memory_space<vmem>>, vector<90x60xbf16>
    %cst_50 = arith.constant dense<0.000000e+00> : vector<8x60xf32>
    %92 = tpu.matmul %90, %91, %cst_50 {dimension_numbers = #tpu.dot_dimension_numbers<[1], [0], [0], [1], [0, 0, 1, 1], [], []>} : vector<8x90xbf16>, vector<90x60xbf16>, vector<8x60xf32> -> vector<8x60xf32>
    %c0_51 = arith.constant 0 : index
    %c0_52 = arith.constant 0 : index
    %93 = vector.load %arg19[%c0_51, %c0_52] : memref<1x60xf32, #tpu.memory_space<vmem>>, vector<1x60xf32>
    %94 = vector.broadcast %93 : vector<1x60xf32> to vector<8x60xf32>
    %95 = arith.addf %92, %94 : vector<8x60xf32>
    %cst_53 = arith.constant 0.000000e+00 : f32
    %96 = vector.broadcast %cst_53 : f32 to vector<8x60xf32>
    %97 = arith.maximumf %95, %96 : vector<8x60xf32>
    %98 = arith.truncf %97 : vector<8x60xf32> to vector<8x60xbf16>
    %c0_54 = arith.constant 0 : index
    %c0_55 = arith.constant 0 : index
    %99 = vector.load %arg20[%c0_54, %c0_55] : memref<60x30xbf16, #tpu.memory_space<vmem>>, vector<60x30xbf16>
    %cst_56 = arith.constant dense<0.000000e+00> : vector<8x30xf32>
    %100 = tpu.matmul %98, %99, %cst_56 {dimension_numbers = #tpu.dot_dimension_numbers<[1], [0], [0], [1], [0, 0, 1, 1], [], []>} : vector<8x60xbf16>, vector<60x30xbf16>, vector<8x30xf32> -> vector<8x30xf32>
    %c0_57 = arith.constant 0 : index
    %c0_58 = arith.constant 0 : index
    %101 = vector.load %arg21[%c0_57, %c0_58] : memref<1x30xf32, #tpu.memory_space<vmem>>, vector<1x30xf32>
    %102 = vector.broadcast %101 : vector<1x30xf32> to vector<8x30xf32>
    %103 = arith.addf %100, %102 : vector<8x30xf32>
    %cst_59 = arith.constant 0.000000e+00 : f32
    %104 = vector.broadcast %cst_59 : f32 to vector<8x30xf32>
    %105 = arith.maximumf %103, %104 : vector<8x30xf32>
    %106 = arith.truncf %105 : vector<8x30xf32> to vector<8x30xbf16>
    %c0_60 = arith.constant 0 : index
    %c0_61 = arith.constant 0 : index
    %107 = vector.load %arg22[%c0_60, %c0_61] : memref<30x128xbf16, #tpu.memory_space<vmem>>, vector<30x128xbf16>
    %cst_62 = arith.constant dense<0.000000e+00> : vector<8x128xf32>
    %108 = tpu.matmul %106, %107, %cst_62 {dimension_numbers = #tpu.dot_dimension_numbers<[1], [0], [0], [1], [0, 0, 1, 1], [], []>} : vector<8x30xbf16>, vector<30x128xbf16>, vector<8x128xf32> -> vector<8x128xf32>
    %c0_63 = arith.constant 0 : index
    %c0_64 = arith.constant 0 : index
    %109 = vector.load %arg23[%c0_63, %c0_64] : memref<1x128xf32, #tpu.memory_space<vmem>>, vector<1x128xf32>
    %110 = vector.broadcast %109 : vector<1x128xf32> to vector<8x128xf32>
    %111 = arith.addf %108, %110 : vector<8x128xf32>
    %cst_65 = arith.constant dense<0xFF800000> : vector<8xf32>
    %112 = vector.multi_reduction <maximumf>, %111, %cst_65 [1] : vector<8x128xf32> to vector<8xf32>
    %113 = vector.shape_cast %112 : vector<8xf32> to vector<8x1xf32>
    %114 = vector.broadcast %113 : vector<8x1xf32> to vector<8x128xf32>
    %115 = arith.subf %111, %114 : vector<8x128xf32>
    %116 = math.exp %115 : vector<8x128xf32>
    %cst_66 = arith.constant dense<0.000000e+00> : vector<8xf32>
    %117 = vector.multi_reduction <add>, %116, %cst_66 [1] : vector<8x128xf32> to vector<8xf32>
    %118 = vector.shape_cast %117 : vector<8xf32> to vector<8x1xf32>
    %119 = math.log %118 : vector<8x1xf32>
    %120 = arith.addf %113, %119 : vector<8x1xf32>
    %121 = vector.broadcast %120 : vector<8x1xf32> to vector<8x128xf32>
    %122 = arith.subf %111, %121 : vector<8x128xf32>
    %c0_67 = arith.constant 0 : index
    %c0_68 = arith.constant 0 : index
    %123 = vector.load %arg24[%c0_67, %c0_68] : memref<8x128xf32, #tpu.memory_space<vmem>>, vector<8x128xf32>
    tpu.vector_store %arg24[%c0_67, %c0_68], %122 {strides = array<i32>} : memref<8x128xf32, #tpu.memory_space<vmem>>, vector<8x128xf32>,
    return
  }
  func.func @transform_0(%arg0: i32) -> (i32, i32) {
    %c0_i32 = arith.constant 0 : i32
    %c0_i32_0 = arith.constant 0 : i32
    return %arg0, %c0_i32 : i32, i32
  }
  func.func @transform_1(%arg0: i32) -> (i32, i32) {
    %c0_i32 = arith.constant 0 : i32
    %c0_i32_0 = arith.constant 0 : i32
    %c0_i32_1 = arith.constant 0 : i32
    return %c0_i32, %c0_i32_0 : i32, i32
  }
  func.func @transform_2(%arg0: i32) -> (i32, i32) {
    %c0_i32 = arith.constant 0 : i32
    %c0_i32_0 = arith.constant 0 : i32
    %c0_i32_1 = arith.constant 0 : i32
    return %c0_i32, %c0_i32_0 : i32, i32
  }
  func.func @transform_3(%arg0: i32) -> (i32, i32) {
    %c0_i32 = arith.constant 0 : i32
    %c0_i32_0 = arith.constant 0 : i32
    %c0_i32_1 = arith.constant 0 : i32
    return %c0_i32, %c0_i32_0 : i32, i32
  }
  func.func @transform_4(%arg0: i32) -> (i32, i32) {
    %c0_i32 = arith.constant 0 : i32
    %c0_i32_0 = arith.constant 0 : i32
    %c0_i32_1 = arith.constant 0 : i32
    return %c0_i32, %c0_i32_0 : i32, i32
  }
  func.func @transform_5(%arg0: i32) -> (i32, i32) {
    %c0_i32 = arith.constant 0 : i32
    %c0_i32_0 = arith.constant 0 : i32
    %c0_i32_1 = arith.constant 0 : i32
    return %c0_i32, %c0_i32_0 : i32, i32
  }
  func.func @transform_6(%arg0: i32) -> (i32, i32) {
    %c0_i32 = arith.constant 0 : i32
    %c0_i32_0 = arith.constant 0 : i32
    %c0_i32_1 = arith.constant 0 : i32
    return %c0_i32, %c0_i32_0 : i32, i32
  }
  func.func @transform_7(%arg0: i32) -> (i32, i32) {
    %c0_i32 = arith.constant 0 : i32
    %c0_i32_0 = arith.constant 0 : i32
    %c0_i32_1 = arith.constant 0 : i32
    return %c0_i32, %c0_i32_0 : i32, i32
  }
  func.func @transform_8(%arg0: i32) -> (i32, i32) {
    %c0_i32 = arith.constant 0 : i32
    %c0_i32_0 = arith.constant 0 : i32
    %c0_i32_1 = arith.constant 0 : i32
    return %c0_i32, %c0_i32_0 : i32, i32
  }
  func.func @transform_9(%arg0: i32) -> (i32, i32) {
    %c0_i32 = arith.constant 0 : i32
    %c0_i32_0 = arith.constant 0 : i32
    %c0_i32_1 = arith.constant 0 : i32
    return %c0_i32, %c0_i32_0 : i32, i32
  }
  func.func @transform_10(%arg0: i32) -> (i32, i32) {
    %c0_i32 = arith.constant 0 : i32
    %c0_i32_0 = arith.constant 0 : i32
    %c0_i32_1 = arith.constant 0 : i32
    return %c0_i32, %c0_i32_0 : i32, i32
  }
  func.func @transform_11(%arg0: i32) -> (i32, i32) {
    %c0_i32 = arith.constant 0 : i32
    %c0_i32_0 = arith.constant 0 : i32
    %c0_i32_1 = arith.constant 0 : i32
    return %c0_i32, %c0_i32_0 : i32, i32
  }
  func.func @transform_12(%arg0: i32) -> (i32, i32) {
    %c0_i32 = arith.constant 0 : i32
    %c0_i32_0 = arith.constant 0 : i32
    %c0_i32_1 = arith.constant 0 : i32
    return %c0_i32, %c0_i32_0 : i32, i32
  }
  func.func @transform_13(%arg0: i32) -> (i32, i32) {
    %c0_i32 = arith.constant 0 : i32
    %c0_i32_0 = arith.constant 0 : i32
    %c0_i32_1 = arith.constant 0 : i32
    return %c0_i32, %c0_i32_0 : i32, i32
  }
  func.func @transform_14(%arg0: i32) -> (i32, i32) {
    %c0_i32 = arith.constant 0 : i32
    %c0_i32_0 = arith.constant 0 : i32
    %c0_i32_1 = arith.constant 0 : i32
    return %c0_i32, %c0_i32_0 : i32, i32
  }
  func.func @transform_15(%arg0: i32) -> (i32, i32) {
    %c0_i32 = arith.constant 0 : i32
    %c0_i32_0 = arith.constant 0 : i32
    %c0_i32_1 = arith.constant 0 : i32
    return %c0_i32, %c0_i32_0 : i32, i32
  }
  func.func @transform_16(%arg0: i32) -> (i32, i32) {
    %c0_i32 = arith.constant 0 : i32
    %c0_i32_0 = arith.constant 0 : i32
    %c0_i32_1 = arith.constant 0 : i32
    return %c0_i32, %c0_i32_0 : i32, i32
  }
  func.func @transform_17(%arg0: i32) -> (i32, i32) {
    %c0_i32 = arith.constant 0 : i32
    %c0_i32_0 = arith.constant 0 : i32
    %c0_i32_1 = arith.constant 0 : i32
    return %c0_i32, %c0_i32_0 : i32, i32
  }
  func.func @transform_18(%arg0: i32) -> (i32, i32) {
    %c0_i32 = arith.constant 0 : i32
    %c0_i32_0 = arith.constant 0 : i32
    %c0_i32_1 = arith.constant 0 : i32
    return %c0_i32, %c0_i32_0 : i32, i32
  }
  func.func @transform_19(%arg0: i32) -> (i32, i32) {
    %c0_i32 = arith.constant 0 : i32
    %c0_i32_0 = arith.constant 0 : i32
    %c0_i32_1 = arith.constant 0 : i32
    return %c0_i32, %c0_i32_0 : i32, i32
  }
  func.func @transform_20(%arg0: i32) -> (i32, i32) {
    %c0_i32 = arith.constant 0 : i32
    %c0_i32_0 = arith.constant 0 : i32
    %c0_i32_1 = arith.constant 0 : i32
    return %c0_i32, %c0_i32_0 : i32, i32
  }
  func.func @transform_21(%arg0: i32) -> (i32, i32) {
    %c0_i32 = arith.constant 0 : i32
    %c0_i32_0 = arith.constant 0 : i32
    %c0_i32_1 = arith.constant 0 : i32
    return %c0_i32, %c0_i32_0 : i32, i32
  }
  func.func @transform_22(%arg0: i32) -> (i32, i32) {
    %c0_i32 = arith.constant 0 : i32
    %c0_i32_0 = arith.constant 0 : i32
    %c0_i32_1 = arith.constant 0 : i32
    return %c0_i32, %c0_i32_0 : i32, i32
  }
  func.func @transform_23(%arg0: i32) -> (i32, i32) {
    %c0_i32 = arith.constant 0 : i32
    %c0_i32_0 = arith.constant 0 : i32
    return %arg0, %c0_i32 : i32, i32
  }
}

</mosaic_0001>

<llo_original>
// kernel: model5_forward.1
$region0: #{model5_forward.1}
  #allocation0 [shape = 'u32[]', space=smem, size = 0x4, offset = 0x4, fixed_abs, tag = 'smem constant byte address 0x4 - core index']
  #allocation1 [shape = 'u32[144,128]{1,0:T(1,128)}', space=vmem, size = 0x12000, scoped, tag = 'internal scratch']
  %s0 = inlined_call_operand.vmem [shape: bf16[128,49], index: 0, kind: input, shape index: {}]
  %s1 = inlined_call_operand.vmem [shape: bf16[49,120], index: 1, kind: input, shape index: {}]
  %s2 = inlined_call_operand.vmem [shape: f32[1,120], index: 2, kind: input, shape index: {}]
  %s3 = inlined_call_operand.vmem [shape: bf16[120,90], index: 3, kind: input, shape index: {}]
  %s4 = inlined_call_operand.vmem [shape: f32[1,90], index: 4, kind: input, shape index: {}]
  %s5 = inlined_call_operand.vmem [shape: bf16[90,60], index: 5, kind: input, shape index: {}]
  %s6 = inlined_call_operand.vmem [shape: f32[1,60], index: 6, kind: input, shape index: {}]
  %s7 = inlined_call_operand.vmem [shape: bf16[60,30], index: 7, kind: input, shape index: {}]
  %s8 = inlined_call_operand.vmem [shape: f32[1,30], index: 8, kind: input, shape index: {}]
  %s9 = inlined_call_operand.vmem [shape: bf16[120,90], index: 9, kind: input, shape index: {}]
  %s10 = inlined_call_operand.vmem [shape: f32[1,90], index: 10, kind: input, shape index: {}]
  %s11 = inlined_call_operand.vmem [shape: bf16[90,60], index: 11, kind: input, shape index: {}]
  %s12 = inlined_call_operand.vmem [shape: f32[1,60], index: 12, kind: input, shape index: {}]
  %s13 = inlined_call_operand.vmem [shape: bf16[60,30], index: 13, kind: input, shape index: {}]
  %s14 = inlined_call_operand.vmem [shape: f32[1,30], index: 14, kind: input, shape index: {}]
  %s15 = inlined_call_operand.vmem [shape: bf16[120,90], index: 15, kind: input, shape index: {}]
  %s16 = inlined_call_operand.vmem [shape: f32[1,90], index: 16, kind: input, shape index: {}]
  %s17 = inlined_call_operand.vmem [shape: bf16[90,60], index: 17, kind: input, shape index: {}]
  %s18 = inlined_call_operand.vmem [shape: f32[1,60], index: 18, kind: input, shape index: {}]
  %s19 = inlined_call_operand.vmem [shape: bf16[60,30], index: 19, kind: input, shape index: {}]
  %s20 = inlined_call_operand.vmem [shape: f32[1,30], index: 20, kind: input, shape index: {}]
  %s21 = inlined_call_operand.vmem [shape: bf16[30,128], index: 21, kind: input, shape index: {}]
  %s22 = inlined_call_operand.vmem [shape: f32[1,128], index: 22, kind: input, shape index: {}]
  %s23 = inlined_call_operand.vmem [shape: f32[8,128], index: 23, kind: output, shape index: {}]
  %s24 = sld [smem:[#allocation0]]
  $region102: #{model5_forward.1} parent=0
    _
  %s26 = ssub.s32 1, %s24
  %s27 = scalar_select 0, %s26, %s24
  // Predicated region
  $region2: #{model5_forward.1} parent=0 // pred_check
    _
  $region3: #{model5_forward.1} parent=0 // pred_check_branch
    %29 = sbr.rel (0) target = $region5
  $region4: #{model5_forward.1} parent=0 // pred_region
    _
  $region5: #{model5_forward.1} parent=0 // pred_fallthru
    _
  // Predicated region
  $region6: #{model5_forward.1} parent=0 // pred_check
    _
  $region7: #{model5_forward.1} parent=0 // pred_check_branch
    %31 = sbr.rel (0) target = $region9
  $region8: #{model5_forward.1} parent=0 // pred_region
    _
  $region9: #{model5_forward.1} parent=0 // pred_fallthru
    _
  // Predicated region
  $region10: #{model5_forward.1} parent=0 // pred_check
    _
  $region11: #{model5_forward.1} parent=0 // pred_check_branch
    %33 = sbr.rel (0) target = $region13
  $region12: #{model5_forward.1} parent=0 // pred_region
    _
  $region13: #{model5_forward.1} parent=0 // pred_fallthru
    _
  // Predicated region
  $region14: #{model5_forward.1} parent=0 // pred_check
    _
  $region15: #{model5_forward.1} parent=0 // pred_check_branch
    %35 = sbr.rel (0) target = $region17
  $region16: #{model5_forward.1} parent=0 // pred_region
    _
  $region17: #{model5_forward.1} parent=0 // pred_fallthru
    _
  // Predicated region
  $region18: #{model5_forward.1} parent=0 // pred_check
    _
  $region19: #{model5_forward.1} parent=0 // pred_check_branch
    %37 = sbr.rel (0) target = $region21
  $region20: #{model5_forward.1} parent=0 // pred_region
    _
  $region21: #{model5_forward.1} parent=0 // pred_fallthru
    _
  // Predicated region
  $region22: #{model5_forward.1} parent=0 // pred_check
    _
  $region23: #{model5_forward.1} parent=0 // pred_check_branch
    %39 = sbr.rel (0) target = $region25
  $region24: #{model5_forward.1} parent=0 // pred_region
    _
  $region25: #{model5_forward.1} parent=0 // pred_fallthru
    _
  // Predicated region
  $region26: #{model5_forward.1} parent=0 // pred_check
    _
  $region27: #{model5_forward.1} parent=0 // pred_check_branch
    %41 = sbr.rel (0) target = $region29
  $region28: #{model5_forward.1} parent=0 // pred_region
    _
  $region29: #{model5_forward.1} parent=0 // pred_fallthru
    _
  // Predicated region
  $region30: #{model5_forward.1} parent=0 // pred_check
    _
  $region31: #{model5_forward.1} parent=0 // pred_check_branch
    %43 = sbr.rel (0) target = $region33
  $region32: #{model5_forward.1} parent=0 // pred_region
    _
  $region33: #{model5_forward.1} parent=0 // pred_fallthru
    _
  // Predicated region
  $region34: #{model5_forward.1} parent=0 // pred_check
    _
  $region35: #{model5_forward.1} parent=0 // pred_check_branch
    %45 = sbr.rel (0) target = $region37
  $region36: #{model5_forward.1} parent=0 // pred_region
    _
  $region37: #{model5_forward.1} parent=0 // pred_fallthru
    _
  // Predicated region
  $region38: #{model5_forward.1} parent=0 // pred_check
    _
  $region39: #{model5_forward.1} parent=0 // pred_check_branch
    %47 = sbr.rel (0) target = $region41
  $region40: #{model5_forward.1} parent=0 // pred_region
    _
  $region41: #{model5_forward.1} parent=0 // pred_fallthru
    _
  // Predicated region
  $region42: #{model5_forward.1} parent=0 // pred_check
    _
  $region43: #{model5_forward.1} parent=0 // pred_check_branch
    %49 = sbr.rel (0) target = $region45
  $region44: #{model5_forward.1} parent=0 // pred_region
    _
  $region45: #{model5_forward.1} parent=0 // pred_fallthru
    _
  // Predicated region
  $region46: #{model5_forward.1} parent=0 // pred_check
    _
  $region47: #{model5_forward.1} parent=0 // pred_check_branch
    %51 = sbr.rel (0) target = $region49
  $region48: #{model5_forward.1} parent=0 // pred_region
    _
  $region49: #{model5_forward.1} parent=0 // pred_fallthru
    _
  // Predicated region
  $region50: #{model5_forward.1} parent=0 // pred_check
    _
  $region51: #{model5_forward.1} parent=0 // pred_check_branch
    %53 = sbr.rel (0) target = $region53
  $region52: #{model5_forward.1} parent=0 // pred_region
    _
  $region53: #{model5_forward.1} parent=0 // pred_fallthru
    _
  // Predicated region
  $region54: #{model5_forward.1} parent=0 // pred_check
    _
  $region55: #{model5_forward.1} parent=0 // pred_check_branch
    %55 = sbr.rel (0) target = $region57
  $region56: #{model5_forward.1} parent=0 // pred_region
    _
  $region57: #{model5_forward.1} parent=0 // pred_fallthru
    _
  // Predicated region
  $region58: #{model5_forward.1} parent=0 // pred_check
    _
  $region59: #{model5_forward.1} parent=0 // pred_check_branch
    %57 = sbr.rel (0) target = $region61
  $region60: #{model5_forward.1} parent=0 // pred_region
    _
  $region61: #{model5_forward.1} parent=0 // pred_fallthru
    _
  // Predicated region
  $region62: #{model5_forward.1} parent=0 // pred_check
    _
  $region63: #{model5_forward.1} parent=0 // pred_check_branch
    %59 = sbr.rel (0) target = $region65
  $region64: #{model5_forward.1} parent=0 // pred_region
    _
  $region65: #{model5_forward.1} parent=0 // pred_fallthru
    _
  // Predicated region
  $region66: #{model5_forward.1} parent=0 // pred_check
    _
  $region67: #{model5_forward.1} parent=0 // pred_check_branch
    %61 = sbr.rel (0) target = $region69
  $region68: #{model5_forward.1} parent=0 // pred_region
    _
  $region69: #{model5_forward.1} parent=0 // pred_fallthru
    _
  // Predicated region
  $region70: #{model5_forward.1} parent=0 // pred_check
    _
  $region71: #{model5_forward.1} parent=0 // pred_check_branch
    %63 = sbr.rel (0) target = $region73
  $region72: #{model5_forward.1} parent=0 // pred_region
    _
  $region73: #{model5_forward.1} parent=0 // pred_fallthru
    _
  // Predicated region
  $region74: #{model5_forward.1} parent=0 // pred_check
    _
  $region75: #{model5_forward.1} parent=0 // pred_check_branch
    %65 = sbr.rel (0) target = $region77
  $region76: #{model5_forward.1} parent=0 // pred_region
    _
  $region77: #{model5_forward.1} parent=0 // pred_fallthru
    _
  // Predicated region
  $region78: #{model5_forward.1} parent=0 // pred_check
    _
  $region79: #{model5_forward.1} parent=0 // pred_check_branch
    %67 = sbr.rel (0) target = $region81
  $region80: #{model5_forward.1} parent=0 // pred_region
    _
  $region81: #{model5_forward.1} parent=0 // pred_fallthru
    _
  // Predicated region
  $region82: #{model5_forward.1} parent=0 // pred_check
    _
  $region83: #{model5_forward.1} parent=0 // pred_check_branch
    %69 = sbr.rel (0) target = $region85
  $region84: #{model5_forward.1} parent=0 // pred_region
    _
  $region85: #{model5_forward.1} parent=0 // pred_fallthru
    _
  // Predicated region
  $region86: #{model5_forward.1} parent=0 // pred_check
    _
  $region87: #{model5_forward.1} parent=0 // pred_check_branch
    %71 = sbr.rel (0) target = $region89
  $region88: #{model5_forward.1} parent=0 // pred_region
    _
  $region89: #{model5_forward.1} parent=0 // pred_fallthru
    _
  // Predicated region
  $region90: #{model5_forward.1} parent=0 // pred_check
    _
  $region91: #{model5_forward.1} parent=0 // pred_check_branch
    %73 = sbr.rel (0) target = $region93
  $region92: #{model5_forward.1} parent=0 // pred_region
    _
  $region93: #{model5_forward.1} parent=0 // pred_fallthru
    _
  %v75 = vld [vmem:[%s0] sm:$0xf]
  %v76 = vld [vmem:[%s0 + $0x4] sm:$0xf]
  %v77 = vld [vmem:[%s0 + $0x8] sm:$0xf]
  %v78 = vld [vmem:[%s0 + $0xc] sm:$0xf]
  %v79 = vld [vmem:[%s0 + $0x10] sm:$0xf]
  %v80 = vld [vmem:[%s0 + $0x14] sm:$0xf]
  %v81 = vld [vmem:[%s0 + $0x18] sm:$0xf]
  %v82 = vld [vmem:[%s0 + $0x1c] sm:$0xf]
  %v83 = vld [vmem:[%s0 + $0x20] sm:$0xf]
  %v84 = vld [vmem:[%s0 + $0x24] sm:$0xf]
  %v85 = vld [vmem:[%s0 + $0x28] sm:$0xf]
  %v86 = vld [vmem:[%s0 + $0x2c] sm:$0xf]
  %v87 = vld [vmem:[%s0 + $0x30] sm:$0xf]
  %v88 = vld [vmem:[%s0 + $0x34] sm:$0xf]
  %v89 = vld [vmem:[%s0 + $0x38] sm:$0xf]
  %v90 = vld [vmem:[%s0 + $0x3c] sm:$0xf]
  %v91 = vld [vmem:[%s1] sm:$0xf]
  %v92 = vld [vmem:[%s1 + $0x4] sm:$0xf]
  %v93 = vld [vmem:[%s1 + $0x8] sm:$0xf]
  %v94 = vld [vmem:[%s1 + $0xc] sm:$0xf]
  %v95 = vld [vmem:[%s1 + $0x10] sm:$0xf]
  %v96 = vld [vmem:[%s1 + $0x14] sm:$0xf]
  %v97 = vld [vmem:[%s1 + $0x18] sm:$0x1]
  %v98 = vld [vmem:[%s2] sm:$0x1]
  %v100 = vlaneseq
  %v101 = vshrl.u32 %v100, 7
  %v102 = vsub.s32 0, %v101
  %v103 = vrot.slane %v98, %v102
  %v121 = vunpack.c.l.b16 %v75
  %v122 = vunpack.c.l.b16 %v76
  %v123 = vunpack.c.l.b16 %v77
  %v124 = vunpack.c.l.b16 %v78
  %v125 = vunpack.c.l.b16 %v79
  %v126 = vunpack.c.l.b16 %v80
  %v127 = vunpack.c.l.b16 %v81
  %v128 = vunpack.c.l.b16 %v82
  %v129 = vunpack.c.l.b16 %v83
  %v130 = vunpack.c.l.b16 %v84
  %v131 = vunpack.c.l.b16 %v85
  %v132 = vunpack.c.l.b16 %v86
  %v133 = vunpack.c.l.b16 %v87
  %v134 = vunpack.c.l.b16 %v88
  %v135 = vunpack.c.l.b16 %v89
  %v136 = vunpack.c.l.b16 %v90
  %v137 = vpack.c.b16 %v122, %v121
  %v138 = vpack.c.b16 %v124, %v123
  %v139 = vpack.c.b16 %v126, %v125
  %v140 = vpack.c.b16 %v128, %v127
  %v141 = vpack.c.b16 %v130, %v129
  %v142 = vpack.c.b16 %v132, %v131
  %v143 = vpack.c.b16 %v134, %v133
  %v144 = vpack.c.b16 %v136, %v135
  %v152 = vunpack.c.l.b16 %v91
  %v153 = vunpack.c.l.b16 %v92
  %v154 = vunpack.c.l.b16 %v93
  %v155 = vunpack.c.l.b16 %v94
  %v156 = vunpack.c.l.b16 %v95
  %v157 = vunpack.c.l.b16 %v96
  %v158 = vunpack.c.l.b16 %v97
  %v159 = vpack.c.b16 %v153, %v152
  %v160 = vpack.c.b16 %v155, %v154
  %v161 = vpack.c.b16 %v157, %v156
  %v162 = vpack.c.b16 %v158, %v158
  %vm166 = vcmask 400384
  %v168 = vsel %vm166, %v137, 0
  %v171 = vsel %vm166, %v138, 0
  %v174 = vsel %vm166, %v139, 0
  %v177 = vsel %vm166, %v140, 0
  %v180 = vsel %vm166, %v141, 0
  %v183 = vsel %vm166, %v142, 0
  %v186 = vsel %vm166, %v143, 0
  %v189 = vsel %vm166, %v144, 0
  %vm191 = vcmask 1040384
  %v192 = vsel 0, 4294967295, 65535
  %v193 = vsel %vm191, %v192, 0
  %v195 = vand.u32 %v162, %v193
  %197 = vmatprep.subr.bf16.mxu0 0
  %198 = vmatpush1.bf16.msra.mxu0 0
  %199 = vmatprep.subr.bf16.mxu0 0
  %200 = vmatpush1.bf16.msra.mxu0 0
  %201 = vmatprep.subr.bf16.mxu0 0
  %202 = vmatpush1.bf16.msra.mxu0 0
  %203 = vmatprep.subr.bf16.mxu0 0
  %204 = vmatpush1.bf16.msra.mxu0 0
  %205 = vmatprep.subr.bf16.mxu0 0
  %206 = vmatpush1.bf16.msra.mxu0 %v195
  %207 = vmatprep.subr.bf16.mxu0 0
  %208 = vmatpush1.bf16.msra.mxu0 %v161
  %209 = vmatprep.subr.bf16.mxu0 0
  %210 = vmatpush1.bf16.msra.mxu0 %v160
  %211 = vmatprep.subr.bf16.mxu0 0
  %212 = vmatpush1.bf16.msra.mxu0 %v159
  %213 = vmatprep.subr.bf16.mxu0 0
  %214 = vmatpush2.bf16.msra.mxu0 0
  %215 = vmatprep.subr.bf16.mxu0 0
  %216 = vmatpush2.bf16.msra.mxu0 0
  %217 = vmatprep.subr.bf16.mxu0 0
  %218 = vmatpush2.bf16.msra.mxu0 0
  %219 = vmatprep.subr.bf16.mxu0 0
  %220 = vmatpush2.bf16.msra.mxu0 0
  %221 = vmatprep.subr.bf16.mxu0 0
  %222 = vmatpush2.bf16.msra.mxu0 0
  %223 = vmatprep.subr.bf16.mxu0 0
  %224 = vmatpush2.bf16.msra.mxu0 0
  %225 = vmatprep.subr.bf16.mxu0 0
  %226 = vmatpush2.bf16.msra.mxu0 0
  %227 = vmatprep.subr.bf16.mxu0 0
  %228 = vmatpush2.bf16.msra.mxu0 0
  %229 = vmatprep.mubr.bf16.mxu0 0
  %230 = vmatmul.mubr.bf16.gmra.mxu0 %v168
  %v231 = vpop.f32.mrf.mxu0
  %v232 = vadd.f32 %v103, %v231
  %v233 = vpop.f32.mrf.mxu0
  %v234 = vpop.f32.mrf.mxu0
  %v235 = vadd.f32 %v103, %v234
  %v236 = vpop.f32.mrf.mxu0
  %237 = vmatprep.mubr.bf16.mxu0 0
  %238 = vmatmul.mubr.bf16.gmra.mxu0 %v171
  %v239 = vpop.f32.mrf.mxu0
  %v240 = vadd.f32 %v103, %v239
  %v241 = vpop.f32.mrf.mxu0
  %v242 = vpop.f32.mrf.mxu0
  %v243 = vadd.f32 %v103, %v242
  %v244 = vpop.f32.mrf.mxu0
  %245 = vmatprep.mubr.bf16.mxu0 0
  %246 = vmatmul.mubr.bf16.gmra.mxu0 %v174
  %v247 = vpop.f32.mrf.mxu0
  %v248 = vadd.f32 %v103, %v247
  %v249 = vpop.f32.mrf.mxu0
  %v250 = vpop.f32.mrf.mxu0
  %v251 = vadd.f32 %v103, %v250
  %v252 = vpop.f32.mrf.mxu0
  %253 = vmatprep.mubr.bf16.mxu0 0
  %254 = vmatmul.mubr.bf16.gmra.mxu0 %v177
  %v255 = vpop.f32.mrf.mxu0
  %v256 = vadd.f32 %v103, %v255
  %v257 = vpop.f32.mrf.mxu0
  %v258 = vpop.f32.mrf.mxu0
  %v259 = vadd.f32 %v103, %v258
  %v260 = vpop.f32.mrf.mxu0
  %261 = vmatprep.mubr.bf16.mxu0 0
  %262 = vmatmul.mubr.bf16.gmra.mxu0 %v180
  %v263 = vpop.f32.mrf.mxu0
  %v264 = vadd.f32 %v103, %v263
  %v265 = vpop.f32.mrf.mxu0
  %v266 = vpop.f32.mrf.mxu0
  %v267 = vadd.f32 %v103, %v266
  %v268 = vpop.f32.mrf.mxu0
  %269 = vmatprep.mubr.bf16.mxu0 0
  %270 = vmatmul.mubr.bf16.gmra.mxu0 %v183
  %v271 = vpop.f32.mrf.mxu0
  %v272 = vadd.f32 %v103, %v271
  %v273 = vpop.f32.mrf.mxu0
  %v274 = vpop.f32.mrf.mxu0
  %v275 = vadd.f32 %v103, %v274
  %v276 = vpop.f32.mrf.mxu0
  %277 = vmatprep.mubr.bf16.mxu0 0
  %278 = vmatmul.mubr.bf16.gmra.mxu0 %v186
  %v279 = vpop.f32.mrf.mxu0
  %v280 = vadd.f32 %v103, %v279
  %v281 = vpop.f32.mrf.mxu0
  %v282 = vpop.f32.mrf.mxu0
  %v283 = vadd.f32 %v103, %v282
  %v284 = vpop.f32.mrf.mxu0
  %285 = vmatprep.mubr.bf16.mxu0 0
  %286 = vmatmul.mubr.bf16.gmra.mxu0 %v189
  %v287 = vpop.f32.mrf.mxu0
  %v288 = vadd.f32 %v103, %v287
  %v289 = vpop.f32.mrf.mxu0
  %v290 = vpop.f32.mrf.mxu0
  %v291 = vadd.f32 %v103, %v290
  %v292 = vpop.f32.mrf.mxu0
  %293 = vdwg.mxu0
  %v294 = vmax.f32 %v232, 0.0
  %v295 = vmax.f32 %v235, 0.0
  %v296 = vmax.f32 %v240, 0.0
  %v297 = vmax.f32 %v243, 0.0
  %v298 = vmax.f32 %v248, 0.0
  %v299 = vmax.f32 %v251, 0.0
  %v300 = vmax.f32 %v256, 0.0
  %v301 = vmax.f32 %v259, 0.0
  %v302 = vmax.f32 %v264, 0.0
  %v303 = vmax.f32 %v267, 0.0
  %v304 = vmax.f32 %v272, 0.0
  %v305 = vmax.f32 %v275, 0.0
  %v306 = vmax.f32 %v280, 0.0
  %v307 = vmax.f32 %v283, 0.0
  %v308 = vmax.f32 %v288, 0.0
  %v309 = vmax.f32 %v291, 0.0
  %v310 = vpack.c.bf16 %v295, %v294
  %v311 = vpack.c.bf16 %v297, %v296
  %v312 = vpack.c.bf16 %v299, %v298
  %v313 = vpack.c.bf16 %v301, %v300
  %v314 = vpack.c.bf16 %v303, %v302
  %v315 = vpack.c.bf16 %v305, %v304
  %v316 = vpack.c.bf16 %v307, %v306
  %v317 = vpack.c.bf16 %v309, %v308
  %v318 = vld [vmem:[%s3] sm:$0xf]
  %v319 = vld [vmem:[%s3 + $0x4] sm:$0xf]
  %v320 = vld [vmem:[%s3 + $0x8] sm:$0xf]
  %v321 = vld [vmem:[%s3 + $0xc] sm:$0xf]
  %v322 = vld [vmem:[%s3 + $0x10] sm:$0xf]
  %v323 = vld [vmem:[%s3 + $0x14] sm:$0xf]
  %v324 = vld [vmem:[%s3 + $0x18] sm:$0xf]
  %v325 = vld [vmem:[%s3 + $0x1c] sm:$0xf]
  %v326 = vld [vmem:[%s3 + $0x20] sm:$0xf]
  %v327 = vld [vmem:[%s3 + $0x24] sm:$0xf]
  %v328 = vld [vmem:[%s3 + $0x28] sm:$0xf]
  %v329 = vld [vmem:[%s3 + $0x2c] sm:$0xf]
  %v330 = vld [vmem:[%s3 + $0x30] sm:$0xf]
  %v331 = vld [vmem:[%s3 + $0x34] sm:$0xf]
  %v332 = vld [vmem:[%s3 + $0x38] sm:$0xf]
  %v333 = vld [vmem:[%s4] sm:$0x1]
  %v335 = vlaneseq
  %v336 = vshrl.u32 %v335, 7
  %v337 = vsub.s32 0, %v336
  %v338 = vrot.slane %v333, %v337
  %v355 = vunpack.c.l.b16 %v318
  %v356 = vunpack.c.l.b16 %v319
  %v357 = vunpack.c.l.b16 %v320
  %v358 = vunpack.c.l.b16 %v321
  %v359 = vunpack.c.l.b16 %v322
  %v360 = vunpack.c.l.b16 %v323
  %v361 = vunpack.c.l.b16 %v324
  %v362 = vunpack.c.l.b16 %v325
  %v363 = vunpack.c.l.b16 %v326
  %v364 = vunpack.c.l.b16 %v327
  %v365 = vunpack.c.l.b16 %v328
  %v366 = vunpack.c.l.b16 %v329
  %v367 = vunpack.c.l.b16 %v330
  %v368 = vunpack.c.l.b16 %v331
  %v369 = vunpack.c.l.b16 %v332
  %v370 = vpack.c.b16 %v356, %v355
  %v371 = vpack.c.b16 %v358, %v357
  %v372 = vpack.c.b16 %v360, %v359
  %v373 = vpack.c.b16 %v362, %v361
  %v374 = vpack.c.b16 %v364, %v363
  %v375 = vpack.c.b16 %v366, %v365
  %v376 = vpack.c.b16 %v368, %v367
  %v377 = vpack.c.b16 %v369, %v369
  %vm385 = vcmask 982016
  %v387 = vsel %vm385, %v310, 0
  %v390 = vsel %vm385, %v311, 0
  %v393 = vsel %vm385, %v312, 0
  %v396 = vsel %vm385, %v313, 0
  %v399 = vsel %vm385, %v314, 0
  %v402 = vsel %vm385, %v315, 0
  %v405 = vsel %vm385, %v316, 0
  %v408 = vsel %vm385, %v317, 0
  %vm410 = vcmask 1043456
  %v412 = vsel %vm410, %v377, 0
  %414 = vmatprep.subr.bf16.mxu0 0
  %415 = vmatpush1.bf16.msra.mxu0 %v412
  %416 = vmatprep.subr.bf16.mxu0 0
  %417 = vmatpush1.bf16.msra.mxu0 %v376
  %418 = vmatprep.subr.bf16.mxu0 0
  %419 = vmatpush1.bf16.msra.mxu0 %v375
  %420 = vmatprep.subr.bf16.mxu0 0
  %421 = vmatpush1.bf16.msra.mxu0 %v374
  %422 = vmatprep.subr.bf16.mxu0 0
  %423 = vmatpush1.bf16.msra.mxu0 %v373
  %424 = vmatprep.subr.bf16.mxu0 0
  %425 = vmatpush1.bf16.msra.mxu0 %v372
  %426 = vmatprep.subr.bf16.mxu0 0
  %427 = vmatpush1.bf16.msra.mxu0 %v371
  %428 = vmatprep.subr.bf16.mxu0 0
  %429 = vmatpush1.bf16.msra.mxu0 %v370
  %430 = vmatprep.subr.bf16.mxu0 0
  %431 = vmatpush2.bf16.msra.mxu0 0
  %432 = vmatprep.subr.bf16.mxu0 0
  %433 = vmatpush2.bf16.msra.mxu0 0
  %434 = vmatprep.subr.bf16.mxu0 0
  %435 = vmatpush2.bf16.msra.mxu0 0
  %436 = vmatprep.subr.bf16.mxu0 0
  %437 = vmatpush2.bf16.msra.mxu0 0
  %438 = vmatprep.subr.bf16.mxu0 0
  %439 = vmatpush2.bf16.msra.mxu0 0
  %440 = vmatprep.subr.bf16.mxu0 0
  %441 = vmatpush2.bf16.msra.mxu0 0
  %442 = vmatprep.subr.bf16.mxu0 0
  %443 = vmatpush2.bf16.msra.mxu0 0
  %444 = vmatprep.subr.bf16.mxu0 0
  %445 = vmatpush2.bf16.msra.mxu0 0
  %446 = vmatprep.mubr.bf16.mxu0 0
  %447 = vmatmul.mubr.bf16.gmra.mxu0 %v387
  %v448 = vpop.f32.mrf.mxu0
  %v449 = vadd.f32 %v338, %v448
  %v450 = vpop.f32.mrf.mxu0
  %v451 = vpop.f32.mrf.mxu0
  %v452 = vadd.f32 %v338, %v451
  %v453 = vpop.f32.mrf.mxu0
  %454 = vmatprep.mubr.bf16.mxu0 0
  %455 = vmatmul.mubr.bf16.gmra.mxu0 %v390
  %v456 = vpop.f32.mrf.mxu0
  %v457 = vadd.f32 %v338, %v456
  %v458 = vpop.f32.mrf.mxu0
  %v459 = vpop.f32.mrf.mxu0
  %v460 = vadd.f32 %v338, %v459
  %v461 = vpop.f32.mrf.mxu0
  %462 = vmatprep.mubr.bf16.mxu0 0
  %463 = vmatmul.mubr.bf16.gmra.mxu0 %v393
  %v464 = vpop.f32.mrf.mxu0
  %v465 = vadd.f32 %v338, %v464
  %v466 = vpop.f32.mrf.mxu0
  %v467 = vpop.f32.mrf.mxu0
  %v468 = vadd.f32 %v338, %v467
  %v469 = vpop.f32.mrf.mxu0
  %470 = vmatprep.mubr.bf16.mxu0 0
  %471 = vmatmul.mubr.bf16.gmra.mxu0 %v396
  %v472 = vpop.f32.mrf.mxu0
  %v473 = vadd.f32 %v338, %v472
  %v474 = vpop.f32.mrf.mxu0
  %v475 = vpop.f32.mrf.mxu0
  %v476 = vadd.f32 %v338, %v475
  %v477 = vpop.f32.mrf.mxu0
  %478 = vmatprep.mubr.bf16.mxu0 0
  %479 = vmatmul.mubr.bf16.gmra.mxu0 %v399
  %v480 = vpop.f32.mrf.mxu0
  %v481 = vadd.f32 %v338, %v480
  %v482 = vpop.f32.mrf.mxu0
  %v483 = vpop.f32.mrf.mxu0
  %v484 = vadd.f32 %v338, %v483
  %v485 = vpop.f32.mrf.mxu0
  %486 = vmatprep.mubr.bf16.mxu0 0
  %487 = vmatmul.mubr.bf16.gmra.mxu0 %v402
  %v488 = vpop.f32.mrf.mxu0
  %v489 = vadd.f32 %v338, %v488
  %v490 = vpop.f32.mrf.mxu0
  %v491 = vpop.f32.mrf.mxu0
  %v492 = vadd.f32 %v338, %v491
  %v493 = vpop.f32.mrf.mxu0
  %494 = vmatprep.mubr.bf16.mxu0 0
  %495 = vmatmul.mubr.bf16.gmra.mxu0 %v405
  %v496 = vpop.f32.mrf.mxu0
  %v497 = vadd.f32 %v338, %v496
  %v498 = vpop.f32.mrf.mxu0
  %v499 = vpop.f32.mrf.mxu0
  %v500 = vadd.f32 %v338, %v499
  %v501 = vpop.f32.mrf.mxu0
  %502 = vmatprep.mubr.bf16.mxu0 0
  %503 = vmatmul.mubr.bf16.gmra.mxu0 %v408
  %v504 = vpop.f32.mrf.mxu0
  %v505 = vadd.f32 %v338, %v504
  %v506 = vpop.f32.mrf.mxu0
  %v507 = vpop.f32.mrf.mxu0
  %v508 = vadd.f32 %v338, %v507
  %v509 = vpop.f32.mrf.mxu0
  %510 = vdwg.mxu0
  %v511 = vmax.f32 %v449, 0.0
  %v512 = vmax.f32 %v452, 0.0
  %v513 = vmax.f32 %v457, 0.0
  %v514 = vmax.f32 %v460, 0.0
  %v515 = vmax.f32 %v465, 0.0
  %v516 = vmax.f32 %v468, 0.0
  %v517 = vmax.f32 %v473, 0.0
  %v518 = vmax.f32 %v476, 0.0
  %v519 = vmax.f32 %v481, 0.0
  %v520 = vmax.f32 %v484, 0.0
  %v521 = vmax.f32 %v489, 0.0
  %v522 = vmax.f32 %v492, 0.0
  %v523 = vmax.f32 %v497, 0.0
  %v524 = vmax.f32 %v500, 0.0
  %v525 = vmax.f32 %v505, 0.0
  %v526 = vmax.f32 %v508, 0.0
  %v527 = vpack.c.bf16 %v512, %v511
  %v528 = vpack.c.bf16 %v514, %v513
  %v529 = vpack.c.bf16 %v516, %v515
  %v530 = vpack.c.bf16 %v518, %v517
  %v531 = vpack.c.bf16 %v520, %v519
  %v532 = vpack.c.bf16 %v522, %v521
  %v533 = vpack.c.bf16 %v524, %v523
  %v534 = vpack.c.bf16 %v526, %v525
  %v535 = vld [vmem:[%s5] sm:$0xf]
  %v536 = vld [vmem:[%s5 + $0x4] sm:$0xf]
  %v537 = vld [vmem:[%s5 + $0x8] sm:$0xf]
  %v538 = vld [vmem:[%s5 + $0xc] sm:$0xf]
  %v539 = vld [vmem:[%s5 + $0x10] sm:$0xf]
  %v540 = vld [vmem:[%s5 + $0x14] sm:$0xf]
  %v541 = vld [vmem:[%s5 + $0x18] sm:$0xf]
  %v542 = vld [vmem:[%s5 + $0x1c] sm:$0xf]
  %v543 = vld [vmem:[%s5 + $0x20] sm:$0xf]
  %v544 = vld [vmem:[%s5 + $0x24] sm:$0xf]
  %v545 = vld [vmem:[%s5 + $0x28] sm:$0xf]
  %v546 = vld [vmem:[%s5 + $0x2c] sm:$0x1]
  %v547 = vld [vmem:[%s6] sm:$0x1]
  %v549 = vlaneseq
  %v550 = vshrl.u32 %v549, 7
  %v551 = vsub.s32 0, %v550
  %v552 = vrot.slane %v547, %v551
  %v566 = vunpack.c.l.b16 %v535
  %v567 = vunpack.c.l.b16 %v536
  %v568 = vunpack.c.l.b16 %v537
  %v569 = vunpack.c.l.b16 %v538
  %v570 = vunpack.c.l.b16 %v539
  %v571 = vunpack.c.l.b16 %v540
  %v572 = vunpack.c.l.b16 %v541
  %v573 = vunpack.c.l.b16 %v542
  %v574 = vunpack.c.l.b16 %v543
  %v575 = vunpack.c.l.b16 %v544
  %v576 = vunpack.c.l.b16 %v545
  %v577 = vunpack.c.l.b16 %v546
  %v578 = vpack.c.b16 %v567, %v566
  %v579 = vpack.c.b16 %v569, %v568
  %v580 = vpack.c.b16 %v571, %v570
  %v581 = vpack.c.b16 %v573, %v572
  %v582 = vpack.c.b16 %v575, %v574
  %v583 = vpack.c.b16 %v577, %v576
  %vm589 = vcmask 736256
  %v591 = vsel %vm589, %v527, 0
  %v594 = vsel %vm589, %v528, 0
  %v597 = vsel %vm589, %v529, 0
  %v600 = vsel %vm589, %v530, 0
  %v603 = vsel %vm589, %v531, 0
  %v606 = vsel %vm589, %v532, 0
  %v609 = vsel %vm589, %v533, 0
  %v612 = vsel %vm589, %v534, 0
  %vm614 = vcmask 1044480
  %v616 = vsel %vm614, %v583, 0
  %618 = vmatprep.subr.bf16.mxu0 0
  %619 = vmatpush1.bf16.msra.mxu0 0
  %620 = vmatprep.subr.bf16.mxu0 0
  %621 = vmatpush1.bf16.msra.mxu0 0
  %622 = vmatprep.subr.bf16.mxu0 0
  %623 = vmatpush1.bf16.msra.mxu0 %v616
  %624 = vmatprep.subr.bf16.mxu0 0
  %625 = vmatpush1.bf16.msra.mxu0 %v582
  %626 = vmatprep.subr.bf16.mxu0 0
  %627 = vmatpush1.bf16.msra.mxu0 %v581
  %628 = vmatprep.subr.bf16.mxu0 0
  %629 = vmatpush1.bf16.msra.mxu0 %v580
  %630 = vmatprep.subr.bf16.mxu0 0
  %631 = vmatpush1.bf16.msra.mxu0 %v579
  %632 = vmatprep.subr.bf16.mxu0 0
  %633 = vmatpush1.bf16.msra.mxu0 %v578
  %634 = vmatprep.subr.bf16.mxu0 0
  %635 = vmatpush2.bf16.msra.mxu0 0
  %636 = vmatprep.subr.bf16.mxu0 0
  %637 = vmatpush2.bf16.msra.mxu0 0
  %638 = vmatprep.subr.bf16.mxu0 0
  %639 = vmatpush2.bf16.msra.mxu0 0
  %640 = vmatprep.subr.bf16.mxu0 0
  %641 = vmatpush2.bf16.msra.mxu0 0
  %642 = vmatprep.subr.bf16.mxu0 0
  %643 = vmatpush2.bf16.msra.mxu0 0
  %644 = vmatprep.subr.bf16.mxu0 0
  %645 = vmatpush2.bf16.msra.mxu0 0
  %646 = vmatprep.subr.bf16.mxu0 0
  %647 = vmatpush2.bf16.msra.mxu0 0
  %648 = vmatprep.subr.bf16.mxu0 0
  %649 = vmatpush2.bf16.msra.mxu0 0
  %650 = vmatprep.mubr.bf16.mxu0 0
  %651 = vmatmul.mubr.bf16.gmra.mxu0 %v591
  %v652 = vpop.f32.mrf.mxu0
  %v653 = vadd.f32 %v552, %v652
  %v654 = vpop.f32.mrf.mxu0
  %v655 = vpop.f32.mrf.mxu0
  %v656 = vadd.f32 %v552, %v655
  %v657 = vpop.f32.mrf.mxu0
  %658 = vmatprep.mubr.bf16.mxu0 0
  %659 = vmatmul.mubr.bf16.gmra.mxu0 %v594
  %v660 = vpop.f32.mrf.mxu0
  %v661 = vadd.f32 %v552, %v660
  %v662 = vpop.f32.mrf.mxu0
  %v663 = vpop.f32.mrf.mxu0
  %v664 = vadd.f32 %v552, %v663
  %v665 = vpop.f32.mrf.mxu0
  %666 = vmatprep.mubr.bf16.mxu0 0
  %667 = vmatmul.mubr.bf16.gmra.mxu0 %v597
  %v668 = vpop.f32.mrf.mxu0
  %v669 = vadd.f32 %v552, %v668
  %v670 = vpop.f32.mrf.mxu0
  %v671 = vpop.f32.mrf.mxu0
  %v672 = vadd.f32 %v552, %v671
  %v673 = vpop.f32.mrf.mxu0
  %674 = vmatprep.mubr.bf16.mxu0 0
  %675 = vmatmul.mubr.bf16.gmra.mxu0 %v600
  %v676 = vpop.f32.mrf.mxu0
  %v677 = vadd.f32 %v552, %v676
  %v678 = vpop.f32.mrf.mxu0
  %v679 = vpop.f32.mrf.mxu0
  %v680 = vadd.f32 %v552, %v679
  %v681 = vpop.f32.mrf.mxu0
  %682 = vmatprep.mubr.bf16.mxu0 0
  %683 = vmatmul.mubr.bf16.gmra.mxu0 %v603
  %v684 = vpop.f32.mrf.mxu0
  %v685 = vadd.f32 %v552, %v684
  %v686 = vpop.f32.mrf.mxu0
  %v687 = vpop.f32.mrf.mxu0
  %v688 = vadd.f32 %v552, %v687
  %v689 = vpop.f32.mrf.mxu0
  %690 = vmatprep.mubr.bf16.mxu0 0
  %691 = vmatmul.mubr.bf16.gmra.mxu0 %v606
  %v692 = vpop.f32.mrf.mxu0
  %v693 = vadd.f32 %v552, %v692
  %v694 = vpop.f32.mrf.mxu0
  %v695 = vpop.f32.mrf.mxu0
  %v696 = vadd.f32 %v552, %v695
  %v697 = vpop.f32.mrf.mxu0
  %698 = vmatprep.mubr.bf16.mxu0 0
  %699 = vmatmul.mubr.bf16.gmra.mxu0 %v609
  %v700 = vpop.f32.mrf.mxu0
  %v701 = vadd.f32 %v552, %v700
  %v702 = vpop.f32.mrf.mxu0
  %v703 = vpop.f32.mrf.mxu0
  %v704 = vadd.f32 %v552, %v703
  %v705 = vpop.f32.mrf.mxu0
  %706 = vmatprep.mubr.bf16.mxu0 0
  %707 = vmatmul.mubr.bf16.gmra.mxu0 %v612
  %v708 = vpop.f32.mrf.mxu0
  %v709 = vadd.f32 %v552, %v708
  %v710 = vpop.f32.mrf.mxu0
  %v711 = vpop.f32.mrf.mxu0
  %v712 = vadd.f32 %v552, %v711
  %v713 = vpop.f32.mrf.mxu0
  %714 = vdwg.mxu0
  %v715 = vmax.f32 %v653, 0.0
  %v716 = vmax.f32 %v656, 0.0
  %v717 = vmax.f32 %v661, 0.0
  %v718 = vmax.f32 %v664, 0.0
  %v719 = vmax.f32 %v669, 0.0
  %v720 = vmax.f32 %v672, 0.0
  %v721 = vmax.f32 %v677, 0.0
  %v722 = vmax.f32 %v680, 0.0
  %v723 = vmax.f32 %v685, 0.0
  %v724 = vmax.f32 %v688, 0.0
  %v725 = vmax.f32 %v693, 0.0
  %v726 = vmax.f32 %v696, 0.0
  %v727 = vmax.f32 %v701, 0.0
  %v728 = vmax.f32 %v704, 0.0
  %v729 = vmax.f32 %v709, 0.0
  %v730 = vmax.f32 %v712, 0.0
  %v731 = vpack.c.bf16 %v716, %v715
  %v732 = vpack.c.bf16 %v718, %v717
  %v733 = vpack.c.bf16 %v720, %v719
  %v734 = vpack.c.bf16 %v722, %v721
  %v735 = vpack.c.bf16 %v724, %v723
  %v736 = vpack.c.bf16 %v726, %v725
  %v737 = vpack.c.bf16 %v728, %v727
  %v738 = vpack.c.bf16 %v730, %v729
  %v739 = vld [vmem:[%s7] sm:$0xf]
  %v740 = vld [vmem:[%s7 + $0x4] sm:$0xf]
  %v741 = vld [vmem:[%s7 + $0x8] sm:$0xf]
  %v742 = vld [vmem:[%s7 + $0xc] sm:$0xf]
  %v743 = vld [vmem:[%s7 + $0x10] sm:$0xf]
  %v744 = vld [vmem:[%s7 + $0x14] sm:$0xf]
  %v745 = vld [vmem:[%s7 + $0x18] sm:$0xf]
  %v746 = vld [vmem:[%s7 + $0x1c] sm:$0x3]
  %v747 = vld [vmem:[%s8] sm:$0x1]
  %v749 = vlaneseq
  %v750 = vshrl.u32 %v749, 7
  %v751 = vsub.s32 0, %v750
  %v752 = vrot.slane %v747, %v751
  %v762 = vunpack.c.l.b16 %v739
  %v763 = vunpack.c.l.b16 %v740
  %v764 = vunpack.c.l.b16 %v741
  %v765 = vunpack.c.l.b16 %v742
  %v766 = vunpack.c.l.b16 %v743
  %v767 = vunpack.c.l.b16 %v744
  %v768 = vunpack.c.l.b16 %v745
  %v769 = vunpack.c.l.b16 %v746
  %v770 = vpack.c.b16 %v763, %v762
  %v771 = vpack.c.b16 %v765, %v764
  %v772 = vpack.c.b16 %v767, %v766
  %v773 = vpack.c.b16 %v769, %v768
  %vm777 = vcmask 490496
  %v779 = vsel %vm777, %v731, 0
  %v782 = vsel %vm777, %v732, 0
  %v785 = vsel %vm777, %v733, 0
  %v788 = vsel %vm777, %v734, 0
  %v791 = vsel %vm777, %v735, 0
  %v794 = vsel %vm777, %v736, 0
  %v797 = vsel %vm777, %v737, 0
  %v800 = vsel %vm777, %v738, 0
  %vm802 = vcmask 1045504
  %v804 = vsel %vm802, %v773, 0
  %806 = vmatprep.subr.bf16.mxu0 0
  %807 = vmatpush1.bf16.msra.mxu0 0
  %808 = vmatprep.subr.bf16.mxu0 0
  %809 = vmatpush1.bf16.msra.mxu0 0
  %810 = vmatprep.subr.bf16.mxu0 0
  %811 = vmatpush1.bf16.msra.mxu0 0
  %812 = vmatprep.subr.bf16.mxu0 0
  %813 = vmatpush1.bf16.msra.mxu0 0
  %814 = vmatprep.subr.bf16.mxu0 0
  %815 = vmatpush1.bf16.msra.mxu0 %v804
  %816 = vmatprep.subr.bf16.mxu0 0
  %817 = vmatpush1.bf16.msra.mxu0 %v772
  %818 = vmatprep.subr.bf16.mxu0 0
  %819 = vmatpush1.bf16.msra.mxu0 %v771
  %820 = vmatprep.subr.bf16.mxu0 0
  %821 = vmatpush1.bf16.msra.mxu0 %v770
  %822 = vmatprep.subr.bf16.mxu0 0
  %823 = vmatpush2.bf16.msra.mxu0 0
  %824 = vmatprep.subr.bf16.mxu0 0
  %825 = vmatpush2.bf16.msra.mxu0 0
  %826 = vmatprep.subr.bf16.mxu0 0
  %827 = vmatpush2.bf16.msra.mxu0 0
  %828 = vmatprep.subr.bf16.mxu0 0
  %829 = vmatpush2.bf16.msra.mxu0 0
  %830 = vmatprep.subr.bf16.mxu0 0
  %831 = vmatpush2.bf16.msra.mxu0 0
  %832 = vmatprep.subr.bf16.mxu0 0
  %833 = vmatpush2.bf16.msra.mxu0 0
  %834 = vmatprep.subr.bf16.mxu0 0
  %835 = vmatpush2.bf16.msra.mxu0 0
  %836 = vmatprep.subr.bf16.mxu0 0
  %837 = vmatpush2.bf16.msra.mxu0 0
  %838 = vmatprep.mubr.bf16.mxu0 0
  %839 = vmatmul.mubr.bf16.gmra.mxu0 %v779
  %v840 = vpop.f32.mrf.mxu0
  %v841 = vadd.f32 %v752, %v840
  %v842 = vpop.f32.mrf.mxu0
  %v843 = vpop.f32.mrf.mxu0
  %v844 = vadd.f32 %v752, %v843
  %v845 = vpop.f32.mrf.mxu0
  %846 = vmatprep.mubr.bf16.mxu0 0
  %847 = vmatmul.mubr.bf16.gmra.mxu0 %v782
  %v848 = vpop.f32.mrf.mxu0
  %v849 = vadd.f32 %v752, %v848
  %v850 = vpop.f32.mrf.mxu0
  %v851 = vpop.f32.mrf.mxu0
  %v852 = vadd.f32 %v752, %v851
  %v853 = vpop.f32.mrf.mxu0
  %854 = vmatprep.mubr.bf16.mxu0 0
  %855 = vmatmul.mubr.bf16.gmra.mxu0 %v785
  %v856 = vpop.f32.mrf.mxu0
  %v857 = vadd.f32 %v752, %v856
  %v858 = vpop.f32.mrf.mxu0
  %v859 = vpop.f32.mrf.mxu0
  %v860 = vadd.f32 %v752, %v859
  %v861 = vpop.f32.mrf.mxu0
  %862 = vmatprep.mubr.bf16.mxu0 0
  %863 = vmatmul.mubr.bf16.gmra.mxu0 %v788
  %v864 = vpop.f32.mrf.mxu0
  %v865 = vadd.f32 %v752, %v864
  %v866 = vpop.f32.mrf.mxu0
  %v867 = vpop.f32.mrf.mxu0
  %v868 = vadd.f32 %v752, %v867
  %v869 = vpop.f32.mrf.mxu0
  %870 = vmatprep.mubr.bf16.mxu0 0
  %871 = vmatmul.mubr.bf16.gmra.mxu0 %v791
  %v872 = vpop.f32.mrf.mxu0
  %v873 = vadd.f32 %v752, %v872
  %v874 = vpop.f32.mrf.mxu0
  %v875 = vpop.f32.mrf.mxu0
  %v876 = vadd.f32 %v752, %v875
  %v877 = vpop.f32.mrf.mxu0
  %878 = vmatprep.mubr.bf16.mxu0 0
  %879 = vmatmul.mubr.bf16.gmra.mxu0 %v794
  %v880 = vpop.f32.mrf.mxu0
  %v881 = vadd.f32 %v752, %v880
  %v882 = vpop.f32.mrf.mxu0
  %v883 = vpop.f32.mrf.mxu0
  %v884 = vadd.f32 %v752, %v883
  %v885 = vpop.f32.mrf.mxu0
  %886 = vmatprep.mubr.bf16.mxu0 0
  %887 = vmatmul.mubr.bf16.gmra.mxu0 %v797
  %v888 = vpop.f32.mrf.mxu0
  %v889 = vadd.f32 %v752, %v888
  %v890 = vpop.f32.mrf.mxu0
  %v891 = vpop.f32.mrf.mxu0
  %v892 = vadd.f32 %v752, %v891
  %v893 = vpop.f32.mrf.mxu0
  %894 = vmatprep.mubr.bf16.mxu0 0
  %895 = vmatmul.mubr.bf16.gmra.mxu0 %v800
  %v896 = vpop.f32.mrf.mxu0
  %v897 = vadd.f32 %v752, %v896
  %v898 = vpop.f32.mrf.mxu0
  %v899 = vpop.f32.mrf.mxu0
  %v900 = vadd.f32 %v752, %v899
  %v901 = vpop.f32.mrf.mxu0
  %902 = vdwg.mxu0
  %v903 = vmax.f32 %v841, 0.0
  %v904 = vmax.f32 %v844, 0.0
  %v905 = vmax.f32 %v849, 0.0
  %v906 = vmax.f32 %v852, 0.0
  %v907 = vmax.f32 %v857, 0.0
  %v908 = vmax.f32 %v860, 0.0
  %v909 = vmax.f32 %v865, 0.0
  %v910 = vmax.f32 %v868, 0.0
  %v911 = vmax.f32 %v873, 0.0
  %v912 = vmax.f32 %v876, 0.0
  %v913 = vmax.f32 %v881, 0.0
  %v914 = vmax.f32 %v884, 0.0
  %v915 = vmax.f32 %v889, 0.0
  %v916 = vmax.f32 %v892, 0.0
  %v917 = vmax.f32 %v897, 0.0
  %v918 = vmax.f32 %v900, 0.0
  %920 = vrot.lane.b32.xlu0 %v904, 30
  %v921 = vpop.permute.xlu0 %920
  %924 = vrot.lane.b32.xlu0 %v907, 60
  %v925 = vpop.permute.xlu0 %924
  %928 = vrot.lane.b32.xlu0 %v908, 90
  %v929 = vpop.permute.xlu0 %928
  %vm931 = vcmask 244736
  %v932 = vsel %vm931, %v903, %v921
  %v933 = vsel %vm777, %v932, %v925
  %v934 = vsel %vm589, %v933, %v929
  %936 = vrot.lane.b32.xlu0 %v906, 30
  %v937 = vpop.permute.xlu0 %936
  %940 = vrot.lane.b32.xlu0 %v909, 60
  %v941 = vpop.permute.xlu0 %940
  %944 = vrot.lane.b32.xlu0 %v910, 90
  %v945 = vpop.permute.xlu0 %944
  %v947 = vsel %vm931, %v905, %v937
  %v948 = vsel %vm777, %v947, %v941
  %v949 = vsel %vm589, %v948, %v945
  %951 = vrot.lane.b32.xlu0 %v912, 30
  %v952 = vpop.permute.xlu0 %951
  %955 = vrot.lane.b32.xlu0 %v915, 60
  %v956 = vpop.permute.xlu0 %955
  %959 = vrot.lane.b32.xlu0 %v916, 90
  %v960 = vpop.permute.xlu0 %959
  %v962 = vsel %vm931, %v911, %v952
  %v963 = vsel %vm777, %v962, %v956
  %v964 = vsel %vm589, %v963, %v960
  %966 = vrot.lane.b32.xlu0 %v914, 30
  %v967 = vpop.permute.xlu0 %966
  %970 = vrot.lane.b32.xlu0 %v917, 60
  %v971 = vpop.permute.xlu0 %970
  %974 = vrot.lane.b32.xlu0 %v918, 90
  %v975 = vpop.permute.xlu0 %974
  %v977 = vsel %vm931, %v913, %v967
  %v978 = vsel %vm777, %v977, %v971
  %v979 = vsel %vm589, %v978, %v975
  %v980 = vpack.c.bf16 %v949, %v934
  %v981 = vpack.c.bf16 %v979, %v964
  %v982 = vld [vmem:[%s9] sm:$0xf]
  %v983 = vld [vmem:[%s9 + $0x4] sm:$0xf]
  %v984 = vld [vmem:[%s9 + $0x8] sm:$0xf]
  %v985 = vld [vmem:[%s9 + $0xc] sm:$0xf]
  %v986 = vld [vmem:[%s9 + $0x10] sm:$0xf]
  %v987 = vld [vmem:[%s9 + $0x14] sm:$0xf]
  %v988 = vld [vmem:[%s9 + $0x18] sm:$0xf]
  %v989 = vld [vmem:[%s9 + $0x1c] sm:$0xf]
  %v990 = vld [vmem:[%s9 + $0x20] sm:$0xf]
  %v991 = vld [vmem:[%s9 + $0x24] sm:$0xf]
  %v992 = vld [vmem:[%s9 + $0x28] sm:$0xf]
  %v993 = vld [vmem:[%s9 + $0x2c] sm:$0xf]
  %v994 = vld [vmem:[%s9 + $0x30] sm:$0xf]
  %v995 = vld [vmem:[%s9 + $0x34] sm:$0xf]
  %v996 = vld [vmem:[%s9 + $0x38] sm:$0xf]
  %v997 = vld [vmem:[%s10] sm:$0x1]
  %v999 = vlaneseq
  %v1000 = vshrl.u32 %v999, 7
  %v1001 = vsub.s32 0, %v1000
  %v1002 = vrot.slane %v997, %v1001
  %v1019 = vunpack.c.l.b16 %v982
  %v1020 = vunpack.c.l.b16 %v983
  %v1021 = vunpack.c.l.b16 %v984
  %v1022 = vunpack.c.l.b16 %v985
  %v1023 = vunpack.c.l.b16 %v986
  %v1024 = vunpack.c.l.b16 %v987
  %v1025 = vunpack.c.l.b16 %v988
  %v1026 = vunpack.c.l.b16 %v989
  %v1027 = vunpack.c.l.b16 %v990
  %v1028 = vunpack.c.l.b16 %v991
  %v1029 = vunpack.c.l.b16 %v992
  %v1030 = vunpack.c.l.b16 %v993
  %v1031 = vunpack.c.l.b16 %v994
  %v1032 = vunpack.c.l.b16 %v995
  %v1033 = vunpack.c.l.b16 %v996
  %v1034 = vpack.c.b16 %v1020, %v1019
  %v1035 = vpack.c.b16 %v1022, %v1021
  %v1036 = vpack.c.b16 %v1024, %v1023
  %v1037 = vpack.c.b16 %v1026, %v1025
  %v1038 = vpack.c.b16 %v1028, %v1027
  %v1039 = vpack.c.b16 %v1030, %v1029
  %v1040 = vpack.c.b16 %v1032, %v1031
  %v1041 = vpack.c.b16 %v1033, %v1033
  %v1050 = vsel %vm385, %v980, 0
  %v1053 = vsel %vm385, %v981, 0
  %v1056 = vsel %vm410, %v1041, 0
  %1058 = vmatprep.subr.bf16.mxu0 0
  %1059 = vmatpush1.bf16.msra.mxu0 %v1056
  %1060 = vmatprep.subr.bf16.mxu0 0
  %1061 = vmatpush1.bf16.msra.mxu0 %v1040
  %1062 = vmatprep.subr.bf16.mxu0 0
  %1063 = vmatpush1.bf16.msra.mxu0 %v1039
  %1064 = vmatprep.subr.bf16.mxu0 0
  %1065 = vmatpush1.bf16.msra.mxu0 %v1038
  %1066 = vmatprep.subr.bf16.mxu0 0
  %1067 = vmatpush1.bf16.msra.mxu0 %v1037
  %1068 = vmatprep.subr.bf16.mxu0 0
  %1069 = vmatpush1.bf16.msra.mxu0 %v1036
  %1070 = vmatprep.subr.bf16.mxu0 0
  %1071 = vmatpush1.bf16.msra.mxu0 %v1035
  %1072 = vmatprep.subr.bf16.mxu0 0
  %1073 = vmatpush1.bf16.msra.mxu0 %v1034
  %1074 = vmatprep.subr.bf16.mxu0 0
  %1075 = vmatpush2.bf16.msra.mxu0 0
  %1076 = vmatprep.subr.bf16.mxu0 0
  %1077 = vmatpush2.bf16.msra.mxu0 0
  %1078 = vmatprep.subr.bf16.mxu0 0
  %1079 = vmatpush2.bf16.msra.mxu0 0
  %1080 = vmatprep.subr.bf16.mxu0 0
  %1081 = vmatpush2.bf16.msra.mxu0 0
  %1082 = vmatprep.subr.bf16.mxu0 0
  %1083 = vmatpush2.bf16.msra.mxu0 0
  %1084 = vmatprep.subr.bf16.mxu0 0
  %1085 = vmatpush2.bf16.msra.mxu0 0
  %1086 = vmatprep.subr.bf16.mxu0 0
  %1087 = vmatpush2.bf16.msra.mxu0 0
  %1088 = vmatprep.subr.bf16.mxu0 0
  %1089 = vmatpush2.bf16.msra.mxu0 0
  %1090 = vmatprep.mubr.bf16.mxu0 0
  %1091 = vmatmul.mubr.bf16.gmra.mxu0 %v1050
  %v1092 = vpop.f32.mrf.mxu0
  %v1093 = vadd.f32 %v1002, %v1092
  %v1094 = vpop.f32.mrf.mxu0
  %v1095 = vpop.f32.mrf.mxu0
  %v1096 = vadd.f32 %v1002, %v1095
  %v1097 = vpop.f32.mrf.mxu0
  %1098 = vmatprep.mubr.bf16.mxu0 0
  %1099 = vmatmul.mubr.bf16.gmra.mxu0 %v1053
  %v1100 = vpop.f32.mrf.mxu0
  %v1101 = vadd.f32 %v1002, %v1100
  %v1102 = vpop.f32.mrf.mxu0
  %v1103 = vpop.f32.mrf.mxu0
  %v1104 = vadd.f32 %v1002, %v1103
  %v1105 = vpop.f32.mrf.mxu0
  %1106 = vdwg.mxu0
  %v1107 = vmax.f32 %v1093, 0.0
  %v1108 = vmax.f32 %v1096, 0.0
  %v1109 = vmax.f32 %v1101, 0.0
  %v1110 = vmax.f32 %v1104, 0.0
  %v1111 = vpack.c.bf16 %v1108, %v1107
  %v1112 = vpack.c.bf16 %v1110, %v1109
  %v1113 = vld [vmem:[%s11] sm:$0xf]
  %v1114 = vld [vmem:[%s11 + $0x4] sm:$0xf]
  %v1115 = vld [vmem:[%s11 + $0x8] sm:$0xf]
  %v1116 = vld [vmem:[%s11 + $0xc] sm:$0xf]
  %v1117 = vld [vmem:[%s11 + $0x10] sm:$0xf]
  %v1118 = vld [vmem:[%s11 + $0x14] sm:$0xf]
  %v1119 = vld [vmem:[%s11 + $0x18] sm:$0xf]
  %v1120 = vld [vmem:[%s11 + $0x1c] sm:$0xf]
  %v1121 = vld [vmem:[%s11 + $0x20] sm:$0xf]
  %v1122 = vld [vmem:[%s11 + $0x24] sm:$0xf]
  %v1123 = vld [vmem:[%s11 + $0x28] sm:$0xf]
  %v1124 = vld [vmem:[%s11 + $0x2c] sm:$0x1]
  %v1125 = vld [vmem:[%s12] sm:$0x1]
  %v1127 = vlaneseq
  %v1128 = vshrl.u32 %v1127, 7
  %v1129 = vsub.s32 0, %v1128
  %v1130 = vrot.slane %v1125, %v1129
  %v1144 = vunpack.c.l.b16 %v1113
  %v1145 = vunpack.c.l.b16 %v1114
  %v1146 = vunpack.c.l.b16 %v1115
  %v1147 = vunpack.c.l.b16 %v1116
  %v1148 = vunpack.c.l.b16 %v1117
  %v1149 = vunpack.c.l.b16 %v1118
  %v1150 = vunpack.c.l.b16 %v1119
  %v1151 = vunpack.c.l.b16 %v1120
  %v1152 = vunpack.c.l.b16 %v1121
  %v1153 = vunpack.c.l.b16 %v1122
  %v1154 = vunpack.c.l.b16 %v1123
  %v1155 = vunpack.c.l.b16 %v1124
  %v1156 = vpack.c.b16 %v1145, %v1144
  %v1157 = vpack.c.b16 %v1147, %v1146
  %v1158 = vpack.c.b16 %v1149, %v1148
  %v1159 = vpack.c.b16 %v1151, %v1150
  %v1160 = vpack.c.b16 %v1153, %v1152
  %v1161 = vpack.c.b16 %v1155, %v1154
  %v1168 = vsel %vm589, %v1111, 0
  %v1171 = vsel %vm589, %v1112, 0
  %v1174 = vsel %vm614, %v1161, 0
  %1176 = vmatprep.subr.bf16.mxu0 0
  %1177 = vmatpush1.bf16.msra.mxu0 0
  %1178 = vmatprep.subr.bf16.mxu0 0
  %1179 = vmatpush1.bf16.msra.mxu0 0
  %1180 = vmatprep.subr.bf16.mxu0 0
  %1181 = vmatpush1.bf16.msra.mxu0 %v1174
  %1182 = vmatprep.subr.bf16.mxu0 0
  %1183 = vmatpush1.bf16.msra.mxu0 %v1160
  %1184 = vmatprep.subr.bf16.mxu0 0
  %1185 = vmatpush1.bf16.msra.mxu0 %v1159
  %1186 = vmatprep.subr.bf16.mxu0 0
  %1187 = vmatpush1.bf16.msra.mxu0 %v1158
  %1188 = vmatprep.subr.bf16.mxu0 0
  %1189 = vmatpush1.bf16.msra.mxu0 %v1157
  %1190 = vmatprep.subr.bf16.mxu0 0
  %1191 = vmatpush1.bf16.msra.mxu0 %v1156
  %1192 = vmatprep.subr.bf16.mxu0 0
  %1193 = vmatpush2.bf16.msra.mxu0 0
  %1194 = vmatprep.subr.bf16.mxu0 0
  %1195 = vmatpush2.bf16.msra.mxu0 0
  %1196 = vmatprep.subr.bf16.mxu0 0
  %1197 = vmatpush2.bf16.msra.mxu0 0
  %1198 = vmatprep.subr.bf16.mxu0 0
  %1199 = vmatpush2.bf16.msra.mxu0 0
  %1200 = vmatprep.subr.bf16.mxu0 0
  %1201 = vmatpush2.bf16.msra.mxu0 0
  %1202 = vmatprep.subr.bf16.mxu0 0
  %1203 = vmatpush2.bf16.msra.mxu0 0
  %1204 = vmatprep.subr.bf16.mxu0 0
  %1205 = vmatpush2.bf16.msra.mxu0 0
  %1206 = vmatprep.subr.bf16.mxu0 0
  %1207 = vmatpush2.bf16.msra.mxu0 0
  %1208 = vmatprep.mubr.bf16.mxu0 0
  %1209 = vmatmul.mubr.bf16.gmra.mxu0 %v1168
  %v1210 = vpop.f32.mrf.mxu0
  %v1211 = vadd.f32 %v1130, %v1210
  %v1212 = vpop.f32.mrf.mxu0
  %v1213 = vpop.f32.mrf.mxu0
  %v1214 = vadd.f32 %v1130, %v1213
  %v1215 = vpop.f32.mrf.mxu0
  %1216 = vmatprep.mubr.bf16.mxu0 0
  %1217 = vmatmul.mubr.bf16.gmra.mxu0 %v1171
  %v1218 = vpop.f32.mrf.mxu0
  %v1219 = vadd.f32 %v1130, %v1218
  %v1220 = vpop.f32.mrf.mxu0
  %v1221 = vpop.f32.mrf.mxu0
  %v1222 = vadd.f32 %v1130, %v1221
  %v1223 = vpop.f32.mrf.mxu0
  %1224 = vdwg.mxu0
  %v1225 = vmax.f32 %v1211, 0.0
  %v1226 = vmax.f32 %v1214, 0.0
  %v1227 = vmax.f32 %v1219, 0.0
  %v1228 = vmax.f32 %v1222, 0.0
  %v1229 = vpack.c.bf16 %v1226, %v1225
  %v1230 = vpack.c.bf16 %v1228, %v1227
  %v1231 = vld [vmem:[%s13] sm:$0xf]
  %v1232 = vld [vmem:[%s13 + $0x4] sm:$0xf]
  %v1233 = vld [vmem:[%s13 + $0x8] sm:$0xf]
  %v1234 = vld [vmem:[%s13 + $0xc] sm:$0xf]
  %v1235 = vld [vmem:[%s13 + $0x10] sm:$0xf]
  %v1236 = vld [vmem:[%s13 + $0x14] sm:$0xf]
  %v1237 = vld [vmem:[%s13 + $0x18] sm:$0xf]
  %v1238 = vld [vmem:[%s13 + $0x1c] sm:$0x3]
  %v1239 = vld [vmem:[%s14] sm:$0x1]
  %v1241 = vlaneseq
  %v1242 = vshrl.u32 %v1241, 7
  %v1243 = vsub.s32 0, %v1242
  %v1244 = vrot.slane %v1239, %v1243
  %v1254 = vunpack.c.l.b16 %v1231
  %v1255 = vunpack.c.l.b16 %v1232
  %v1256 = vunpack.c.l.b16 %v1233
  %v1257 = vunpack.c.l.b16 %v1234
  %v1258 = vunpack.c.l.b16 %v1235
  %v1259 = vunpack.c.l.b16 %v1236
  %v1260 = vunpack.c.l.b16 %v1237
  %v1261 = vunpack.c.l.b16 %v1238
  %v1262 = vpack.c.b16 %v1255, %v1254
  %v1263 = vpack.c.b16 %v1257, %v1256
  %v1264 = vpack.c.b16 %v1259, %v1258
  %v1265 = vpack.c.b16 %v1261, %v1260
  %v1270 = vsel %vm777, %v1229, 0
  %v1273 = vsel %vm777, %v1230, 0
  %v1276 = vsel %vm802, %v1265, 0
  %1278 = vmatprep.subr.bf16.mxu0 0
  %1279 = vmatpush1.bf16.msra.mxu0 0
  %1280 = vmatprep.subr.bf16.mxu0 0
  %1281 = vmatpush1.bf16.msra.mxu0 0
  %1282 = vmatprep.subr.bf16.mxu0 0
  %1283 = vmatpush1.bf16.msra.mxu0 0
  %1284 = vmatprep.subr.bf16.mxu0 0
  %1285 = vmatpush1.bf16.msra.mxu0 0
  %1286 = vmatprep.subr.bf16.mxu0 0
  %1287 = vmatpush1.bf16.msra.mxu0 %v1276
  %1288 = vmatprep.subr.bf16.mxu0 0
  %1289 = vmatpush1.bf16.msra.mxu0 %v1264
  %1290 = vmatprep.subr.bf16.mxu0 0
  %1291 = vmatpush1.bf16.msra.mxu0 %v1263
  %1292 = vmatprep.subr.bf16.mxu0 0
  %1293 = vmatpush1.bf16.msra.mxu0 %v1262
  %1294 = vmatprep.subr.bf16.mxu0 0
  %1295 = vmatpush2.bf16.msra.mxu0 0
  %1296 = vmatprep.subr.bf16.mxu0 0
  %1297 = vmatpush2.bf16.msra.mxu0 0
  %1298 = vmatprep.subr.bf16.mxu0 0
  %1299 = vmatpush2.bf16.msra.mxu0 0
  %1300 = vmatprep.subr.bf16.mxu0 0
  %1301 = vmatpush2.bf16.msra.mxu0 0
  %1302 = vmatprep.subr.bf16.mxu0 0
  %1303 = vmatpush2.bf16.msra.mxu0 0
  %1304 = vmatprep.subr.bf16.mxu0 0
  %1305 = vmatpush2.bf16.msra.mxu0 0
  %1306 = vmatprep.subr.bf16.mxu0 0
  %1307 = vmatpush2.bf16.msra.mxu0 0
  %1308 = vmatprep.subr.bf16.mxu0 0
  %1309 = vmatpush2.bf16.msra.mxu0 0
  %1310 = vmatprep.mubr.bf16.mxu0 0
  %1311 = vmatmul.mubr.bf16.gmra.mxu0 %v1270
  %v1312 = vpop.f32.mrf.mxu0
  %v1313 = vadd.f32 %v1244, %v1312
  %v1314 = vpop.f32.mrf.mxu0
  %v1315 = vpop.f32.mrf.mxu0
  %v1316 = vadd.f32 %v1244, %v1315
  %v1317 = vpop.f32.mrf.mxu0
  %1318 = vmatprep.mubr.bf16.mxu0 0
  %1319 = vmatmul.mubr.bf16.gmra.mxu0 %v1273
  %v1320 = vpop.f32.mrf.mxu0
  %v1321 = vadd.f32 %v1244, %v1320
  %v1322 = vpop.f32.mrf.mxu0
  %v1323 = vpop.f32.mrf.mxu0
  %v1324 = vadd.f32 %v1244, %v1323
  %v1325 = vpop.f32.mrf.mxu0
  %1326 = vdwg.mxu0
  %v1327 = vmax.f32 %v1313, 0.0
  %v1328 = vmax.f32 %v1316, 0.0
  %v1329 = vmax.f32 %v1321, 0.0
  %v1330 = vmax.f32 %v1324, 0.0
  %1332 = vrot.lane.b32.xlu0 %v1328, 30
  %v1333 = vpop.permute.xlu0 %1332
  %1336 = vrot.lane.b32.xlu0 %v1329, 60
  %v1337 = vpop.permute.xlu0 %1336
  %1340 = vrot.lane.b32.xlu0 %v1330, 90
  %v1341 = vpop.permute.xlu0 %1340
  %v1343 = vsel %vm931, %v1327, %v1333
  %v1344 = vsel %vm777, %v1343, %v1337
  %v1345 = vsel %vm589, %v1344, %v1341
  %v1346 = vpack.c.bf16 %v1345, %v1345
  %v1347 = vld [vmem:[%s15] sm:$0xf]
  %v1348 = vld [vmem:[%s15 + $0x4] sm:$0xf]
  %v1349 = vld [vmem:[%s15 + $0x8] sm:$0xf]
  %v1350 = vld [vmem:[%s15 + $0xc] sm:$0xf]
  %v1351 = vld [vmem:[%s15 + $0x10] sm:$0xf]
  %v1352 = vld [vmem:[%s15 + $0x14] sm:$0xf]
  %v1353 = vld [vmem:[%s15 + $0x18] sm:$0xf]
  %v1354 = vld [vmem:[%s15 + $0x1c] sm:$0xf]
  %v1355 = vld [vmem:[%s15 + $0x20] sm:$0xf]
  %v1356 = vld [vmem:[%s15 + $0x24] sm:$0xf]
  %v1357 = vld [vmem:[%s15 + $0x28] sm:$0xf]
  %v1358 = vld [vmem:[%s15 + $0x2c] sm:$0xf]
  %v1359 = vld [vmem:[%s15 + $0x30] sm:$0xf]
  %v1360 = vld [vmem:[%s15 + $0x34] sm:$0xf]
  %v1361 = vld [vmem:[%s15 + $0x38] sm:$0xf]
  %v1362 = vld [vmem:[%s16] sm:$0x1]
  %v1364 = vlaneseq
  %v1365 = vshrl.u32 %v1364, 7
  %v1366 = vsub.s32 0, %v1365
  %v1367 = vrot.slane %v1362, %v1366
  %v1384 = vunpack.c.l.b16 %v1347
  %v1385 = vunpack.c.l.b16 %v1348
  %v1386 = vunpack.c.l.b16 %v1349
  %v1387 = vunpack.c.l.b16 %v1350
  %v1388 = vunpack.c.l.b16 %v1351
  %v1389 = vunpack.c.l.b16 %v1352
  %v1390 = vunpack.c.l.b16 %v1353
  %v1391 = vunpack.c.l.b16 %v1354
  %v1392 = vunpack.c.l.b16 %v1355
  %v1393 = vunpack.c.l.b16 %v1356
  %v1394 = vunpack.c.l.b16 %v1357
  %v1395 = vunpack.c.l.b16 %v1358
  %v1396 = vunpack.c.l.b16 %v1359
  %v1397 = vunpack.c.l.b16 %v1360
  %v1398 = vunpack.c.l.b16 %v1361
  %v1399 = vpack.c.b16 %v1385, %v1384
  %v1400 = vpack.c.b16 %v1387, %v1386
  %v1401 = vpack.c.b16 %v1389, %v1388
  %v1402 = vpack.c.b16 %v1391, %v1390
  %v1403 = vpack.c.b16 %v1393, %v1392
  %v1404 = vpack.c.b16 %v1395, %v1394
  %v1405 = vpack.c.b16 %v1397, %v1396
  %v1406 = vpack.c.b16 %v1398, %v1398
  %v1415 = vsel %vm385, %v1346, 0
  %v1418 = vsel %vm410, %v1406, 0
  %1420 = vmatprep.subr.bf16.mxu0 0
  %1421 = vmatpush1.bf16.msra.mxu0 %v1418
  %1422 = vmatprep.subr.bf16.mxu0 0
  %1423 = vmatpush1.bf16.msra.mxu0 %v1405
  %1424 = vmatprep.subr.bf16.mxu0 0
  %1425 = vmatpush1.bf16.msra.mxu0 %v1404
  %1426 = vmatprep.subr.bf16.mxu0 0
  %1427 = vmatpush1.bf16.msra.mxu0 %v1403
  %1428 = vmatprep.subr.bf16.mxu0 0
  %1429 = vmatpush1.bf16.msra.mxu0 %v1402
  %1430 = vmatprep.subr.bf16.mxu0 0
  %1431 = vmatpush1.bf16.msra.mxu0 %v1401
  %1432 = vmatprep.subr.bf16.mxu0 0
  %1433 = vmatpush1.bf16.msra.mxu0 %v1400
  %1434 = vmatprep.subr.bf16.mxu0 0
  %1435 = vmatpush1.bf16.msra.mxu0 %v1399
  %1436 = vmatprep.subr.bf16.mxu0 0
  %1437 = vmatpush2.bf16.msra.mxu0 0
  %1438 = vmatprep.subr.bf16.mxu0 0
  %1439 = vmatpush2.bf16.msra.mxu0 0
  %1440 = vmatprep.subr.bf16.mxu0 0
  %1441 = vmatpush2.bf16.msra.mxu0 0
  %1442 = vmatprep.subr.bf16.mxu0 0
  %1443 = vmatpush2.bf16.msra.mxu0 0
  %1444 = vmatprep.subr.bf16.mxu0 0
  %1445 = vmatpush2.bf16.msra.mxu0 0
  %1446 = vmatprep.subr.bf16.mxu0 0
  %1447 = vmatpush2.bf16.msra.mxu0 0
  %1448 = vmatprep.subr.bf16.mxu0 0
  %1449 = vmatpush2.bf16.msra.mxu0 0
  %1450 = vmatprep.subr.bf16.mxu0 0
  %1451 = vmatpush2.bf16.msra.mxu0 0
  %1452 = vmatprep.mubr.bf16.mxu0 0
  %1453 = vmatmul.mubr.bf16.gmra.mxu0 %v1415
  %v1454 = vpop.f32.mrf.mxu0
  %v1455 = vadd.f32 %v1367, %v1454
  %v1456 = vpop.f32.mrf.mxu0
  %v1457 = vpop.f32.mrf.mxu0
  %v1458 = vpop.f32.mrf.mxu0
  %1459 = vdwg.mxu0
  %v1460 = vmax.f32 %v1455, 0.0
  %v1461 = vpack.c.bf16 %v1460, %v1460
  %v1462 = vld [vmem:[%s17] sm:$0xf]
  %v1463 = vld [vmem:[%s17 + $0x4] sm:$0xf]
  %v1464 = vld [vmem:[%s17 + $0x8] sm:$0xf]
  %v1465 = vld [vmem:[%s17 + $0xc] sm:$0xf]
  %v1466 = vld [vmem:[%s17 + $0x10] sm:$0xf]
  %v1467 = vld [vmem:[%s17 + $0x14] sm:$0xf]
  %v1468 = vld [vmem:[%s17 + $0x18] sm:$0xf]
  %v1469 = vld [vmem:[%s17 + $0x1c] sm:$0xf]
  %v1470 = vld [vmem:[%s17 + $0x20] sm:$0xf]
  %v1471 = vld [vmem:[%s17 + $0x24] sm:$0xf]
  %v1472 = vld [vmem:[%s17 + $0x28] sm:$0xf]
  %v1473 = vld [vmem:[%s17 + $0x2c] sm:$0x1]
  %v1474 = vld [vmem:[%s18] sm:$0x1]
  %v1476 = vlaneseq
  %v1477 = vshrl.u32 %v1476, 7
  %v1478 = vsub.s32 0, %v1477
  %v1479 = vrot.slane %v1474, %v1478
  %v1493 = vunpack.c.l.b16 %v1462
  %v1494 = vunpack.c.l.b16 %v1463
  %v1495 = vunpack.c.l.b16 %v1464
  %v1496 = vunpack.c.l.b16 %v1465
  %v1497 = vunpack.c.l.b16 %v1466
  %v1498 = vunpack.c.l.b16 %v1467
  %v1499 = vunpack.c.l.b16 %v1468
  %v1500 = vunpack.c.l.b16 %v1469
  %v1501 = vunpack.c.l.b16 %v1470
  %v1502 = vunpack.c.l.b16 %v1471
  %v1503 = vunpack.c.l.b16 %v1472
  %v1504 = vunpack.c.l.b16 %v1473
  %v1505 = vpack.c.b16 %v1494, %v1493
  %v1506 = vpack.c.b16 %v1496, %v1495
  %v1507 = vpack.c.b16 %v1498, %v1497
  %v1508 = vpack.c.b16 %v1500, %v1499
  %v1509 = vpack.c.b16 %v1502, %v1501
  %v1510 = vpack.c.b16 %v1504, %v1503
  %v1517 = vsel %vm589, %v1461, 0
  %v1520 = vsel %vm614, %v1510, 0
  %1522 = vmatprep.subr.bf16.mxu0 0
  %1523 = vmatpush1.bf16.msra.mxu0 0
  %1524 = vmatprep.subr.bf16.mxu0 0
  %1525 = vmatpush1.bf16.msra.mxu0 0
  %1526 = vmatprep.subr.bf16.mxu0 0
  %1527 = vmatpush1.bf16.msra.mxu0 %v1520
  %1528 = vmatprep.subr.bf16.mxu0 0
  %1529 = vmatpush1.bf16.msra.mxu0 %v1509
  %1530 = vmatprep.subr.bf16.mxu0 0
  %1531 = vmatpush1.bf16.msra.mxu0 %v1508
  %1532 = vmatprep.subr.bf16.mxu0 0
  %1533 = vmatpush1.bf16.msra.mxu0 %v1507
  %1534 = vmatprep.subr.bf16.mxu0 0
  %1535 = vmatpush1.bf16.msra.mxu0 %v1506
  %1536 = vmatprep.subr.bf16.mxu0 0
  %1537 = vmatpush1.bf16.msra.mxu0 %v1505
  %1538 = vmatprep.subr.bf16.mxu0 0
  %1539 = vmatpush2.bf16.msra.mxu0 0
  %1540 = vmatprep.subr.bf16.mxu0 0
  %1541 = vmatpush2.bf16.msra.mxu0 0
  %1542 = vmatprep.subr.bf16.mxu0 0
  %1543 = vmatpush2.bf16.msra.mxu0 0
  %1544 = vmatprep.subr.bf16.mxu0 0
  %1545 = vmatpush2.bf16.msra.mxu0 0
  %1546 = vmatprep.subr.bf16.mxu0 0
  %1547 = vmatpush2.bf16.msra.mxu0 0
  %1548 = vmatprep.subr.bf16.mxu0 0
  %1549 = vmatpush2.bf16.msra.mxu0 0
  %1550 = vmatprep.subr.bf16.mxu0 0
  %1551 = vmatpush2.bf16.msra.mxu0 0
  %1552 = vmatprep.subr.bf16.mxu0 0
  %1553 = vmatpush2.bf16.msra.mxu0 0
  %1554 = vmatprep.mubr.bf16.mxu0 0
  %1555 = vmatmul.mubr.bf16.gmra.mxu0 %v1517
  %v1556 = vpop.f32.mrf.mxu0
  %v1557 = vadd.f32 %v1479, %v1556
  %v1558 = vpop.f32.mrf.mxu0
  %v1559 = vpop.f32.mrf.mxu0
  %v1560 = vpop.f32.mrf.mxu0
  %1561 = vdwg.mxu0
  %v1562 = vmax.f32 %v1557, 0.0
  %v1563 = vpack.c.bf16 %v1562, %v1562
  %v1564 = vld [vmem:[%s19] sm:$0xf]
  %v1565 = vld [vmem:[%s19 + $0x4] sm:$0xf]
  %v1566 = vld [vmem:[%s19 + $0x8] sm:$0xf]
  %v1567 = vld [vmem:[%s19 + $0xc] sm:$0xf]
  %v1568 = vld [vmem:[%s19 + $0x10] sm:$0xf]
  %v1569 = vld [vmem:[%s19 + $0x14] sm:$0xf]
  %v1570 = vld [vmem:[%s19 + $0x18] sm:$0xf]
  %v1571 = vld [vmem:[%s19 + $0x1c] sm:$0x3]
  %v1572 = vld [vmem:[%s20] sm:$0x1]
  %v1574 = vlaneseq
  %v1575 = vshrl.u32 %v1574, 7
  %v1576 = vsub.s32 0, %v1575
  %v1577 = vrot.slane %v1572, %v1576
  %v1587 = vunpack.c.l.b16 %v1564
  %v1588 = vunpack.c.l.b16 %v1565
  %v1589 = vunpack.c.l.b16 %v1566
  %v1590 = vunpack.c.l.b16 %v1567
  %v1591 = vunpack.c.l.b16 %v1568
  %v1592 = vunpack.c.l.b16 %v1569
  %v1593 = vunpack.c.l.b16 %v1570
  %v1594 = vunpack.c.l.b16 %v1571
  %v1595 = vpack.c.b16 %v1588, %v1587
  %v1596 = vpack.c.b16 %v1590, %v1589
  %v1597 = vpack.c.b16 %v1592, %v1591
  %v1598 = vpack.c.b16 %v1594, %v1593
  %v1603 = vsel %vm777, %v1563, 0
  %v1606 = vsel %vm802, %v1598, 0
  %1608 = vmatprep.subr.bf16.mxu0 0
  %1609 = vmatpush1.bf16.msra.mxu0 0
  %1610 = vmatprep.subr.bf16.mxu0 0
  %1611 = vmatpush1.bf16.msra.mxu0 0
  %1612 = vmatprep.subr.bf16.mxu0 0
  %1613 = vmatpush1.bf16.msra.mxu0 0
  %1614 = vmatprep.subr.bf16.mxu0 0
  %1615 = vmatpush1.bf16.msra.mxu0 0
  %1616 = vmatprep.subr.bf16.mxu0 0
  %1617 = vmatpush1.bf16.msra.mxu0 %v1606
  %1618 = vmatprep.subr.bf16.mxu0 0
  %1619 = vmatpush1.bf16.msra.mxu0 %v1597
  %1620 = vmatprep.subr.bf16.mxu0 0
  %1621 = vmatpush1.bf16.msra.mxu0 %v1596
  %1622 = vmatprep.subr.bf16.mxu0 0
  %1623 = vmatpush1.bf16.msra.mxu0 %v1595
  %1624 = vmatprep.subr.bf16.mxu0 0
  %1625 = vmatpush2.bf16.msra.mxu0 0
  %1626 = vmatprep.subr.bf16.mxu0 0
  %1627 = vmatpush2.bf16.msra.mxu0 0
  %1628 = vmatprep.subr.bf16.mxu0 0
  %1629 = vmatpush2.bf16.msra.mxu0 0
  %1630 = vmatprep.subr.bf16.mxu0 0
  %1631 = vmatpush2.bf16.msra.mxu0 0
  %1632 = vmatprep.subr.bf16.mxu0 0
  %1633 = vmatpush2.bf16.msra.mxu0 0
  %1634 = vmatprep.subr.bf16.mxu0 0
  %1635 = vmatpush2.bf16.msra.mxu0 0
  %1636 = vmatprep.subr.bf16.mxu0 0
  %1637 = vmatpush2.bf16.msra.mxu0 0
  %1638 = vmatprep.subr.bf16.mxu0 0
  %1639 = vmatpush2.bf16.msra.mxu0 0
  %1640 = vmatprep.mubr.bf16.mxu0 0
  %1641 = vmatmul.mubr.bf16.gmra.mxu0 %v1603
  %v1642 = vpop.f32.mrf.mxu0
  %v1643 = vadd.f32 %v1577, %v1642
  %v1644 = vpop.f32.mrf.mxu0
  %v1645 = vpop.f32.mrf.mxu0
  %v1646 = vpop.f32.mrf.mxu0
  %1647 = vdwg.mxu0
  %v1648 = vmax.f32 %v1643, 0.0
  %v1649 = vpack.c.bf16 %v1648, %v1648
  %v1650 = vld [vmem:[%s21] sm:$0xf]
  %v1651 = vld [vmem:[%s21 + $0x4] sm:$0xf]
  %v1652 = vld [vmem:[%s21 + $0x8] sm:$0xf]
  %v1653 = vld [vmem:[%s21 + $0xc] sm:$0x7]
  %v1654 = vld [vmem:[%s22] sm:$0x1]
  %v1656 = vlaneseq
  %v1657 = vshrl.u32 %v1656, 7
  %v1658 = vsub.s32 0, %v1657
  %v1659 = vrot.slane %v1654, %v1658
  %v1665 = vunpack.c.l.b16 %v1650
  %v1666 = vunpack.c.l.b16 %v1651
  %v1667 = vunpack.c.l.b16 %v1652
  %v1668 = vunpack.c.l.b16 %v1653
  %v1669 = vpack.c.b16 %v1666, %v1665
  %v1670 = vpack.c.b16 %v1668, %v1667
  %v1673 = vsel %vm931, %v1649, 0
  %vm1675 = vcmask 1046528
  %v1677 = vsel %vm1675, %v1670, 0
  %1679 = vmatprep.subr.bf16.mxu0 0
  %1680 = vmatpush1.bf16.msra.mxu0 0
  %1681 = vmatprep.subr.bf16.mxu0 0
  %1682 = vmatpush1.bf16.msra.mxu0 0
  %1683 = vmatprep.subr.bf16.mxu0 0
  %1684 = vmatpush1.bf16.msra.mxu0 0
  %1685 = vmatprep.subr.bf16.mxu0 0
  %1686 = vmatpush1.bf16.msra.mxu0 0
  %1687 = vmatprep.subr.bf16.mxu0 0
  %1688 = vmatpush1.bf16.msra.mxu0 0
  %1689 = vmatprep.subr.bf16.mxu0 0
  %1690 = vmatpush1.bf16.msra.mxu0 0
  %1691 = vmatprep.subr.bf16.mxu0 0
  %1692 = vmatpush1.bf16.msra.mxu0 %v1677
  %1693 = vmatprep.subr.bf16.mxu0 0
  %1694 = vmatpush1.bf16.msra.mxu0 %v1669
  %1695 = vmatprep.subr.bf16.mxu0 0
  %1696 = vmatpush2.bf16.msra.mxu0 0
  %1697 = vmatprep.subr.bf16.mxu0 0
  %1698 = vmatpush2.bf16.msra.mxu0 0
  %1699 = vmatprep.subr.bf16.mxu0 0
  %1700 = vmatpush2.bf16.msra.mxu0 0
  %1701 = vmatprep.subr.bf16.mxu0 0
  %1702 = vmatpush2.bf16.msra.mxu0 0
  %1703 = vmatprep.subr.bf16.mxu0 0
  %1704 = vmatpush2.bf16.msra.mxu0 0
  %1705 = vmatprep.subr.bf16.mxu0 0
  %1706 = vmatpush2.bf16.msra.mxu0 0
  %1707 = vmatprep.subr.bf16.mxu0 0
  %1708 = vmatpush2.bf16.msra.mxu0 0
  %1709 = vmatprep.subr.bf16.mxu0 0
  %1710 = vmatpush2.bf16.msra.mxu0 0
  %1711 = vmatprep.mubr.bf16.mxu0 0
  %1712 = vmatmul.mubr.bf16.gmra.mxu0 %v1673
  %v1713 = vpop.f32.mrf.mxu0
  %v1714 = vadd.f32 %v1659, %v1713
  %v1715 = vpop.f32.mrf.mxu0
  %v1716 = vpop.f32.mrf.mxu0
  %v1717 = vpop.f32.mrf.mxu0
  %1718 = vdwg.mxu0
  %1719 = vmax.xlane.f32.xlu0 %v1714
  %v1720 = vpop.xlane.xlu0 %1719
  %v1721 = vsub.f32 %v1714, %v1720
  %v1722 = vmul.f32 %v1721, 1.442695
  %v1723 = vpow.pop %v1722
  %1724 = vadd.xlane.f32.xlu0 %v1723
  %v1725 = vpop.xlane.xlu0 %1724
  %v1726 = vlog2.pop %v1725
  %v1727 = vmul.f32 %v1726, 0.6931472
  %v1728 = vadd.f32 %v1720, %v1727
  %v1729 = vsub.f32 %v1714, %v1728
  %1730 = vst [vmem:[%s23] sm:$0xff] %v1729
  // Predicated region
  $region94: #{model5_forward.1} parent=0 // pred_check
    _
  $region95: #{model5_forward.1} parent=0 // pred_check_branch
    %1732 = sbr.rel (0) target = $region97
  $region96: #{model5_forward.1} parent=0 // pred_region
    _
  $region97: #{model5_forward.1} parent=0 // pred_fallthru
    _
  // Predicated region
  $region98: #{model5_forward.1} parent=0 // pred_check
    _
  $region99: #{model5_forward.1} parent=0 // pred_check_branch
    %1734 = sbr.rel (0) target = $region101
  $region100: #{model5_forward.1} parent=0 // pred_region
    _
  $region101: #{model5_forward.1} parent=0 // pred_fallthru
    _

</llo_original>
